<compile_context>
chip_gen: v5e
topology: v5e:2x2
jax: 0.10.0
libtpu: 0.0.40
codegen_flags: <defaults>
</compile_context>

<pallas_src>
import jax
import jax.numpy as jnp
from jax.experimental import pallas as pl
from jax.experimental.pallas import tpu as pltpu

# ----------------------------- config ---------------------------------------
VOCAB = 50          # input_dim
HID_DIM = 32        # hid_dim
N_HEADS = 4
HEAD_DIM = HID_DIM // N_HEADS
PF_DIM = 64         # pf_dim
N_LAYERS = 2
MAX_LEN = 1000
BATCH = 2
SEQ = 8
LN_EPS = 1e-5

EMB_SCALE = float(HID_DIM) ** 0.5
ATTN_INV_SCALE = 1.0 / (float(HEAD_DIM) ** 0.5)

assert HID_DIM % N_HEADS == 0


# --------------------------- kernel helpers ----------------------------------
def _layernorm(x, gamma, beta):
    mu = jnp.mean(x, axis=-1, keepdims=True)
    var = jnp.mean((x - mu) ** 2, axis=-1, keepdims=True)
    return (x - mu) * jax.lax.rsqrt(var + LN_EPS) * gamma + beta


def encoder_fused_kernel(tok_ref, pos_ref, mask_ref,
                         wqkv_ref, bqkv_ref, wo_ref, bo_ref,
                         ln1g_ref, ln1b_ref,
                         w1_ref, b1_ref, w2_ref, b2_ref,
                         ln2g_ref, ln2b_ref,
                         out_ref):
    """Embedding combine + all encoder layers, whole batch in one step."""
    f32 = jnp.float32
    bf16 = jnp.bfloat16

    BS, H = tok_ref.shape          # (B*S, H) folded-batch activation
    S = pos_ref.shape[0]
    B = BS // S
    HD = H // N_HEADS

    # --- src = tok_emb * sqrt(H) + pos_emb (pos broadcast over batch) ---
    x = (tok_ref[...].reshape(B, S, H) * f32(EMB_SCALE)
         + pos_ref[...][None, :, :]).reshape(BS, H)              # (BS, H) f32

    # additive key mask: 0 keep / -1e10 pad  (per batch row)
    neg_bias = jnp.where(mask_ref[...] < 0.5, f32(-1e10), f32(0.0))  # (B, S)

    for l in range(N_LAYERS):      # static unroll; weights stay VMEM-resident
        wqkv = wqkv_ref[l]; bqkv = bqkv_ref[l]
        wo = wo_ref[l];     bo = bo_ref[l]
        w1 = w1_ref[l];     b1 = b1_ref[l]
        w2 = w2_ref[l];     b2 = b2_ref[l]

        # ---- fused QKV projection on the folded batch:  (BS,H) @ (H,3H) ----
        qkv = jnp.dot(x.astype(bf16), wqkv,
                      preferred_element_type=f32) + bqkv          # (BS, 3H) f32
        qkv3 = qkv.reshape(B, S, 3 * H)

        # ---- per-head attention; output projection accumulated in vregs ----
        attn_out = jnp.broadcast_to(bo, (BS, H))                  # start from bias
        for h in range(N_HEADS):   # static unroll over heads
            qs = slice(h * HD, (h + 1) * HD)
            ks = slice(H + h * HD, H + (h + 1) * HD)
            vs = slice(2 * H + h * HD, 2 * H + (h + 1) * HD)
            qh = qkv3[:, :, qs].astype(bf16)                      # (B, S, hd)
            kh = qkv3[:, :, ks].astype(bf16)
            vh = qkv3[:, :, vs].astype(bf16)
            # scores: contract last dim of q and k (no .T relayout)
            e = jnp.einsum('bqd,bkd->bqk', qh, kh,
                           preferred_element_type=f32) * f32(ATTN_INV_SCALE)
            e = e + neg_bias[:, None, :]                          # mask keys
            e = e - jnp.max(e, axis=-1, keepdims=True)
            p = jnp.exp(e)
            p = p * pl.reciprocal(jnp.sum(p, axis=-1, keepdims=True), approx=True)
            ctx = jnp.einsum('bqk,bkd->bqd', p.astype(bf16), vh,
                             preferred_element_type=f32).reshape(BS, HD)
            # per-head slice of the output projection, accumulated in registers
            attn_out = attn_out + jnp.dot(ctx.astype(bf16), wo[qs, :],
                                          preferred_element_type=f32)

        # ---- residual + LayerNorm 1 ----
        h1 = _layernorm(x + attn_out, ln1g_ref[l], ln1b_ref[l])

        # ---- positionwise feedforward + residual + LayerNorm 2 ----
        ff = jnp.dot(h1.astype(bf16), w1, preferred_element_type=f32) + b1
        ff = jnp.maximum(ff, f32(0.0))
        ff = jnp.dot(ff.astype(bf16), w2, preferred_element_type=f32) + b2
        x = _layernorm(h1 + ff, ln2g_ref[l], ln2b_ref[l])

    out_ref[...] = x.reshape(B, S, H)


# ----------------------------- wrappers --------------------------------------
_WEIGHT_ORDER = ("wqkv", "bqkv", "wo", "bo", "ln1g", "ln1b",
                 "w1", "b1", "w2", "b2", "ln2g", "ln2b")


def pack_params(params):
    """Stack per-layer params along a leading N_LAYERS axis; bf16 matmul weights.

    Called ONCE at init (outside jit) -- the packed arrays are passed straight
    into the jitted forward, so no repacking happens per call.
    """
    acc = {k: [] for k in _WEIGHT_ORDER}
    for (wq, bq, wk, bk, wv, bv, wo, bo,
         ln1g, ln1b, w1, b1, w2, b2, ln2g, ln2b) in params["layers"]:
        acc["wqkv"].append(jnp.concatenate([wq, wk, wv], axis=1))   # (H, 3H)
        acc["bqkv"].append(jnp.concatenate([bq, bk, bv], axis=1))   # (1, 3H)
        acc["wo"].append(wo); acc["bo"].append(bo)
        acc["ln1g"].append(ln1g); acc["ln1b"].append(ln1b)
        acc["w1"].append(w1); acc["b1"].append(b1)
        acc["w2"].append(w2); acc["b2"].append(b2)
        acc["ln2g"].append(ln2g); acc["ln2b"].append(ln2b)
    stacked = {k: jnp.stack(v, axis=0) for k, v in acc.items()}
    for k in ("wqkv", "wo", "w1", "w2"):        # MXU inputs in bf16
        stacked[k] = stacked[k].astype(jnp.bfloat16)
    return stacked


def _cost_estimate(B, S):
    H, PF, L, NH, HD = HID_DIM, PF_DIM, N_LAYERS, N_HEADS, HEAD_DIM
    BS = B * S
    dense_flops = 2 * BS * H * (3 * H + H + 2 * PF)          # qkv + out-proj + ffn
    attn_flops = 2 * B * NH * (2 * S * S * HD)               # scores + context
    flops = L * (dense_flops + attn_flops)
    transcendentals = L * B * NH * S * S                      # softmax exp
    in_bytes = (BS * H + S * H + B * S) * 4
    w_bytes = L * ((H * 3 * H + H * H + H * PF + PF * H) * 2  # bf16 matmul weights
                   + (3 * H + H + PF + H + 4 * H) * 4)        # f32 biases + LN
    out_bytes = B * S * H * 4
    return pl.CostEstimate(flops=flops, transcendentals=transcendentals,
                           bytes_accessed=in_bytes + w_bytes + out_bytes)


def encoder_fused(tok_e, pos_e, mask, packed):
    """Single grid-less pallas_call: everything VMEM-resident, one step."""
    BS, H = tok_e.shape
    S = pos_e.shape[0]
    B = BS // S
    vmem = pl.BlockSpec(memory_space=pltpu.MemorySpace.VMEM)   # untiled, resident
    weights = [packed[k] for k in _WEIGHT_ORDER]
    return pl.pallas_call(
        encoder_fused_kernel,
        out_shape=jax.ShapeDtypeStruct((B, S, H), jnp.float32),
        in_specs=[vmem] * (3 + len(weights)),
        out_specs=vmem,
        cost_estimate=_cost_estimate(B, S),
    )(tok_e, pos_e, mask, *weights)


@jax.jit
def encoder_forward(src, src_mask, tok_emb, pos_emb, packed):
    """Full Encoder.forward (dropout = identity). `packed` is pre-packed at init."""
    B, S = src.shape
    # TODO(synk): token-table gather stays in plain JAX (16 rows of a 50x32 table).
    tok_e = jnp.take(tok_emb, src.reshape(-1), axis=0)   # (B*S, H)
    pos_e = pos_emb[:S]                                  # (S, H) -- broadcast in-kernel
    return encoder_fused(tok_e, pos_e, src_mask, packed)


# ---------------------------- parameter init ---------------------------------
def init_params(key):
    n_weights_per_layer = 6  # q, k, v, o, ff1, ff2
    keys = jax.random.split(key, 2 + N_LAYERS * (n_weights_per_layer + 1))

    def dense(k, d_in, d_out):
        kw, kb = jax.random.split(k)
        w = jax.random.normal(kw, (d_in, d_out), jnp.float32) * 0.02
        b = jax.random.normal(kb, (1, d_out), jnp.float32) * 0.02
        return w, b

    tok_emb = jax.random.normal(keys[0], (VOCAB, HID_DIM), jnp.float32) * 0.02
    pos_emb = jax.random.normal(keys[1], (MAX_LEN, HID_DIM), jnp.float32) * 0.02

    layers = []
    ki = 2
    for _ in range(N_LAYERS):
        wq, bq = dense(keys[ki + 0], HID_DIM, HID_DIM)
        wk, bk = dense(keys[ki + 1], HID_DIM, HID_DIM)
        wv, bv = dense(keys[ki + 2], HID_DIM, HID_DIM)
        wo, bo = dense(keys[ki + 3], HID_DIM, HID_DIM)
        w1, b1 = dense(keys[ki + 4], HID_DIM, PF_DIM)
        w2, b2 = dense(keys[ki + 5], PF_DIM, HID_DIM)
        kln = jax.random.split(keys[ki + 6], 4)
        ki += n_weights_per_layer + 1
        ln1g = 1.0 + jax.random.normal(kln[0], (1, HID_DIM), jnp.float32) * 0.1
        ln1b = jax.random.normal(kln[1], (1, HID_DIM), jnp.float32) * 0.1
        ln2g = 1.0 + jax.random.normal(kln[2], (1, HID_DIM), jnp.float32) * 0.1
        ln2b = jax.random.normal(kln[3], (1, HID_DIM), jnp.float32) * 0.1
        layers.append((wq, bq, wk, bk, wv, bv, wo, bo,
                       ln1g, ln1b, w1, b1, w2, b2, ln2g, ln2b))
    return {"tok_emb": tok_emb, "pos_emb": pos_emb, "layers": layers}


# --------------------------- pure-JAX reference -------------------------------
def ref_layernorm(x, g, b):
    mu = jnp.mean(x, axis=-1, keepdims=True)
    var = jnp.mean((x - mu) ** 2, axis=-1, keepdims=True)
    return (x - mu) / jnp.sqrt(var + LN_EPS) * g + b


def ref_encoder(src, mask, params):
    B, S = src.shape
    pos = jnp.arange(S)[None, :].repeat(B, axis=0)
    x = (jnp.take(params["tok_emb"], src, axis=0) * jnp.sqrt(jnp.float32(HID_DIM))
         + jnp.take(params["pos_emb"], pos, axis=0))
    for (wq, bq, wk, bk, wv, bv, wo, bo,
         ln1g, ln1b, w1, b1, w2, b2, ln2g, ln2b) in params["layers"]:
        q = (x @ wq + bq).reshape(B, S, N_HEADS, HEAD_DIM).transpose(0, 2, 1, 3)
        k = (x @ wk + bk).reshape(B, S, N_HEADS, HEAD_DIM).transpose(0, 2, 1, 3)
        v = (x @ wv + bv).reshape(B, S, N_HEADS, HEAD_DIM).transpose(0, 2, 1, 3)
        e = jnp.einsum("bhqd,bhkd->bhqk", q, k) / jnp.sqrt(jnp.float32(HEAD_DIM))
        e = jnp.where(mask[:, None, None, :] == 0, -1e10, e)
        a = jax.nn.softmax(e, axis=-1)
        ctx = jnp.einsum("bhqk,bhkd->bhqd", a, v).transpose(0, 2, 1, 3)
        ctx = ctx.reshape(B, S, HID_DIM)
        attn_out = ctx @ wo + bo
        h1 = ref_layernorm(x + attn_out, ln1g, ln1b)
        ff = jnp.maximum(h1 @ w1 + b1, 0.0) @ w2 + b2
        x = ref_layernorm(h1 + ff, ln2g, ln2b)
    return x


# --------------------------------- main ---------------------------------------
if __name__ == "__main__":
    key = jax.random.PRNGKey(0)
    k_param, k_src = jax.random.split(key)

    params = init_params(k_param)
    packed = pack_params(params)    # pack / bf16-cast ONCE, outside the jit path

    src = jax.random.randint(k_src, (BATCH, SEQ), 0, VOCAB, dtype=jnp.int32)
    # mask: first example full length, second padded after 5 tokens
    lengths = jnp.array([SEQ, 5], dtype=jnp.int32)
    src_mask = (jnp.arange(SEQ)[None, :] < lengths[:, None]).astype(jnp.float32)

    out = encoder_forward(src, src_mask, params["tok_emb"], params["pos_emb"], packed)
    out = jax.block_until_ready(out)

    ref = ref_encoder(src, src_mask, params)
    assert out.shape == (BATCH, SEQ, HID_DIM)
    assert bool(jnp.all(jnp.isfinite(out)))
    # bf16 MXU inputs (f32 accumulation) + approx reciprocal -> loose tolerance
    assert bool(jnp.allclose(out, ref, atol=3e-2, rtol=3e-2)), "mismatch vs reference"

    print("KERNEL_OK")
</pallas_src>

<mosaic_0001>
module attributes {stable_mosaic.version = 11 : i64} {
  func.func @encoder_fused_kernel(%arg0: memref<16x32xf32, #tpu.memory_space<vmem>>, %arg1: memref<8x32xf32, #tpu.memory_space<vmem>>, %arg2: memref<2x8xf32, #tpu.memory_space<vmem>>, %arg3: memref<2x32x96xbf16, #tpu.memory_space<vmem>>, %arg4: memref<2x1x96xf32, #tpu.memory_space<vmem>>, %arg5: memref<2x32x32xbf16, #tpu.memory_space<vmem>>, %arg6: memref<2x1x32xf32, #tpu.memory_space<vmem>>, %arg7: memref<2x1x32xf32, #tpu.memory_space<vmem>>, %arg8: memref<2x1x32xf32, #tpu.memory_space<vmem>>, %arg9: memref<2x32x64xbf16, #tpu.memory_space<vmem>>, %arg10: memref<2x1x64xf32, #tpu.memory_space<vmem>>, %arg11: memref<2x64x32xbf16, #tpu.memory_space<vmem>>, %arg12: memref<2x1x32xf32, #tpu.memory_space<vmem>>, %arg13: memref<2x1x32xf32, #tpu.memory_space<vmem>>, %arg14: memref<2x1x32xf32, #tpu.memory_space<vmem>>, %arg15: memref<2x8x32xf32, #tpu.memory_space<vmem>>) attributes {dimension_semantics = [], scalar_prefetch = 0 : i64, scratch_operands = 0 : i64, tpu.core_type = #tpu.core_type<tc>} {
    %c0 = arith.constant 0 : index
    %c0_0 = arith.constant 0 : index
    %0 = vector.load %arg0[%c0, %c0_0] : memref<16x32xf32, #tpu.memory_space<vmem>>, vector<16x32xf32>
    %1 = vector.shape_cast %0 : vector<16x32xf32> to vector<2x8x32xf32>
    %cst = arith.constant 5.65685415 : f32
    %2 = vector.broadcast %cst : f32 to vector<2x8x32xf32>
    %3 = arith.mulf %1, %2 : vector<2x8x32xf32>
    %c0_1 = arith.constant 0 : index
    %c0_2 = arith.constant 0 : index
    %4 = vector.load %arg1[%c0_1, %c0_2] : memref<8x32xf32, #tpu.memory_space<vmem>>, vector<8x32xf32>
    %5 = vector.shape_cast %4 : vector<8x32xf32> to vector<1x8x32xf32>
    %6 = vector.broadcast %5 : vector<1x8x32xf32> to vector<2x8x32xf32>
    %7 = arith.addf %3, %6 : vector<2x8x32xf32>
    %8 = vector.shape_cast %7 : vector<2x8x32xf32> to vector<16x32xf32>
    %c0_3 = arith.constant 0 : index
    %c0_4 = arith.constant 0 : index
    %9 = vector.load %arg2[%c0_3, %c0_4] : memref<2x8xf32, #tpu.memory_space<vmem>>, vector<2x8xf32>
    %cst_5 = arith.constant 5.000000e-01 : f32
    %10 = vector.broadcast %cst_5 : f32 to vector<2x8xf32>
    %11 = arith.cmpf olt, %9, %10 : vector<2x8xf32>
    %cst_6 = arith.constant -1.000000e+10 : f32
    %cst_7 = arith.constant 0.000000e+00 : f32
    %12 = vector.broadcast %cst_6 : f32 to vector<2x8xf32>
    %13 = vector.broadcast %cst_7 : f32 to vector<2x8xf32>
    %14 = arith.select %11, %12, %13 : vector<2x8xi1>, vector<2x8xf32>
    %c0_8 = arith.constant 0 : index
    %c0_9 = arith.constant 0 : index
    %c0_10 = arith.constant 0 : index
    %15 = vector.load %arg3[%c0_8, %c0_9, %c0_10] : memref<2x32x96xbf16, #tpu.memory_space<vmem>>, vector<1x32x96xbf16>
    %16 = vector.shape_cast %15 : vector<1x32x96xbf16> to vector<32x96xbf16>
    %c0_11 = arith.constant 0 : index
    %c0_12 = arith.constant 0 : index
    %c0_13 = arith.constant 0 : index
    %17 = vector.load %arg4[%c0_11, %c0_12, %c0_13] : memref<2x1x96xf32, #tpu.memory_space<vmem>>, vector<1x1x96xf32>
    %18 = vector.shape_cast %17 : vector<1x1x96xf32> to vector<1x96xf32>
    %c0_14 = arith.constant 0 : index
    %c0_15 = arith.constant 0 : index
    %c0_16 = arith.constant 0 : index
    %19 = vector.load %arg5[%c0_14, %c0_15, %c0_16] : memref<2x32x32xbf16, #tpu.memory_space<vmem>>, vector<1x32x32xbf16>
    %20 = vector.shape_cast %19 : vector<1x32x32xbf16> to vector<32x32xbf16>
    %c0_17 = arith.constant 0 : index
    %c0_18 = arith.constant 0 : index
    %c0_19 = arith.constant 0 : index
    %21 = vector.load %arg6[%c0_17, %c0_18, %c0_19] : memref<2x1x32xf32, #tpu.memory_space<vmem>>, vector<1x1x32xf32>
    %22 = vector.shape_cast %21 : vector<1x1x32xf32> to vector<1x32xf32>
    %c0_20 = arith.constant 0 : index
    %c0_21 = arith.constant 0 : index
    %c0_22 = arith.constant 0 : index
    %23 = vector.load %arg9[%c0_20, %c0_21, %c0_22] : memref<2x32x64xbf16, #tpu.memory_space<vmem>>, vector<1x32x64xbf16>
    %24 = vector.shape_cast %23 : vector<1x32x64xbf16> to vector<32x64xbf16>
    %c0_23 = arith.constant 0 : index
    %c0_24 = arith.constant 0 : index
    %c0_25 = arith.constant 0 : index
    %25 = vector.load %arg10[%c0_23, %c0_24, %c0_25] : memref<2x1x64xf32, #tpu.memory_space<vmem>>, vector<1x1x64xf32>
    %26 = vector.shape_cast %25 : vector<1x1x64xf32> to vector<1x64xf32>
    %c0_26 = arith.constant 0 : index
    %c0_27 = arith.constant 0 : index
    %c0_28 = arith.constant 0 : index
    %27 = vector.load %arg11[%c0_26, %c0_27, %c0_28] : memref<2x64x32xbf16, #tpu.memory_space<vmem>>, vector<1x64x32xbf16>
    %28 = vector.shape_cast %27 : vector<1x64x32xbf16> to vector<64x32xbf16>
    %c0_29 = arith.constant 0 : index
    %c0_30 = arith.constant 0 : index
    %c0_31 = arith.constant 0 : index
    %29 = vector.load %arg12[%c0_29, %c0_30, %c0_31] : memref<2x1x32xf32, #tpu.memory_space<vmem>>, vector<1x1x32xf32>
    %30 = vector.shape_cast %29 : vector<1x1x32xf32> to vector<1x32xf32>
    %31 = arith.truncf %8 : vector<16x32xf32> to vector<16x32xbf16>
    %cst_32 = arith.constant dense<0.000000e+00> : vector<16x96xf32>
    %32 = tpu.matmul %31, %16, %cst_32 {dimension_numbers = #tpu.dot_dimension_numbers<[1], [0], [0], [1], [0, 0, 1, 1], [], []>} : vector<16x32xbf16>, vector<32x96xbf16>, vector<16x96xf32> -> vector<16x96xf32>
    %33 = vector.broadcast %18 : vector<1x96xf32> to vector<16x96xf32>
    %34 = arith.addf %32, %33 : vector<16x96xf32>
    %35 = vector.shape_cast %34 : vector<16x96xf32> to vector<2x8x96xf32>
    %36 = vector.shape_cast %22 : vector<1x32xf32> to vector<1x32xf32>
    %37 = vector.broadcast %36 : vector<1x32xf32> to vector<16x32xf32>
    %38 = vector.extract_strided_slice %35 {offsets = [0, 0, 0], sizes = [2, 8, 8], strides = [1, 1, 1]} : vector<2x8x96xf32> to vector<2x8x8xf32>
    %39 = arith.truncf %38 : vector<2x8x8xf32> to vector<2x8x8xbf16>
    %40 = vector.extract_strided_slice %35 {offsets = [0, 0, 32], sizes = [2, 8, 8], strides = [1, 1, 1]} : vector<2x8x96xf32> to vector<2x8x8xf32>
    %41 = arith.truncf %40 : vector<2x8x8xf32> to vector<2x8x8xbf16>
    %42 = vector.extract_strided_slice %35 {offsets = [0, 0, 64], sizes = [2, 8, 8], strides = [1, 1, 1]} : vector<2x8x96xf32> to vector<2x8x8xf32>
    %43 = arith.truncf %42 : vector<2x8x8xf32> to vector<2x8x8xbf16>
    "tpu.trace_start"() <{level = 10 : i32, message = "bqd,bkd->bqk"}> : () -> ()
    %cst_33 = arith.constant dense<0.000000e+00> : vector<2x8x8xf32>
    %44 = tpu.matmul %39, %41, %cst_33 {dimension_numbers = #tpu.dot_dimension_numbers<[2], [2], [1], [1], [0, 0, 0, 1, 1, 1], [0], [0]>} : vector<2x8x8xbf16>, vector<2x8x8xbf16>, vector<2x8x8xf32> -> vector<2x8x8xf32>
    "tpu.trace_stop"() : () -> ()
    %cst_34 = arith.constant 0.353553385 : f32
    %45 = vector.broadcast %cst_34 : f32 to vector<2x8x8xf32>
    %46 = arith.mulf %44, %45 : vector<2x8x8xf32>
    %47 = vector.shape_cast %14 : vector<2x8xf32> to vector<2x1x8xf32>
    %48 = vector.broadcast %47 : vector<2x1x8xf32> to vector<2x8x8xf32>
    %49 = arith.addf %46, %48 : vector<2x8x8xf32>
    %cst_35 = arith.constant dense<0xFF800000> : vector<2x8xf32>
    %50 = vector.multi_reduction <maximumf>, %49, %cst_35 [2] : vector<2x8x8xf32> to vector<2x8xf32>
    %51 = vector.shape_cast %50 : vector<2x8xf32> to vector<2x8x1xf32>
    %52 = vector.broadcast %51 : vector<2x8x1xf32> to vector<2x8x8xf32>
    %53 = arith.subf %49, %52 : vector<2x8x8xf32>
    %54 = math.exp %53 : vector<2x8x8xf32>
    %cst_36 = arith.constant dense<0.000000e+00> : vector<2x8xf32>
    %55 = vector.multi_reduction <add>, %54, %cst_36 [2] : vector<2x8x8xf32> to vector<2x8xf32>
    %56 = vector.shape_cast %55 : vector<2x8xf32> to vector<2x8x1xf32>
    %57 = tpu.reciprocal %56 {approx = true} : vector<2x8x1xf32> -> vector<2x8x1xf32>
    %58 = vector.broadcast %57 : vector<2x8x1xf32> to vector<2x8x8xf32>
    %59 = arith.mulf %54, %58 : vector<2x8x8xf32>
    %60 = arith.truncf %59 : vector<2x8x8xf32> to vector<2x8x8xbf16>
    "tpu.trace_start"() <{level = 10 : i32, message = "bqk,bkd->bqd"}> : () -> ()
    %cst_37 = arith.constant dense<0.000000e+00> : vector<2x8x8xf32>
    %61 = tpu.matmul %60, %43, %cst_37 {dimension_numbers = #tpu.dot_dimension_numbers<[2], [1], [1], [2], [0, 0, 0, 1, 1, 2], [0], [0]>} : vector<2x8x8xbf16>, vector<2x8x8xbf16>, vector<2x8x8xf32> -> vector<2x8x8xf32>
    "tpu.trace_stop"() : () -> ()
    %62 = vector.shape_cast %61 : vector<2x8x8xf32> to vector<16x8xf32>
    %63 = arith.truncf %62 : vector<16x8xf32> to vector<16x8xbf16>
    %64 = vector.extract_strided_slice %20 {offsets = [0, 0], sizes = [8, 32], strides = [1, 1]} : vector<32x32xbf16> to vector<8x32xbf16>
    %cst_38 = arith.constant dense<0.000000e+00> : vector<16x32xf32>
    %65 = tpu.matmul %63, %64, %cst_38 {dimension_numbers = #tpu.dot_dimension_numbers<[1], [0], [0], [1], [0, 0, 1, 1], [], []>} : vector<16x8xbf16>, vector<8x32xbf16>, vector<16x32xf32> -> vector<16x32xf32>
    %66 = arith.addf %37, %65 : vector<16x32xf32>
    %67 = vector.extract_strided_slice %35 {offsets = [0, 0, 8], sizes = [2, 8, 8], strides = [1, 1, 1]} : vector<2x8x96xf32> to vector<2x8x8xf32>
    %68 = arith.truncf %67 : vector<2x8x8xf32> to vector<2x8x8xbf16>
    %69 = vector.extract_strided_slice %35 {offsets = [0, 0, 40], sizes = [2, 8, 8], strides = [1, 1, 1]} : vector<2x8x96xf32> to vector<2x8x8xf32>
    %70 = arith.truncf %69 : vector<2x8x8xf32> to vector<2x8x8xbf16>
    %71 = vector.extract_strided_slice %35 {offsets = [0, 0, 72], sizes = [2, 8, 8], strides = [1, 1, 1]} : vector<2x8x96xf32> to vector<2x8x8xf32>
    %72 = arith.truncf %71 : vector<2x8x8xf32> to vector<2x8x8xbf16>
    "tpu.trace_start"() <{level = 10 : i32, message = "bqd,bkd->bqk"}> : () -> ()
    %cst_39 = arith.constant dense<0.000000e+00> : vector<2x8x8xf32>
    %73 = tpu.matmul %68, %70, %cst_39 {dimension_numbers = #tpu.dot_dimension_numbers<[2], [2], [1], [1], [0, 0, 0, 1, 1, 1], [0], [0]>} : vector<2x8x8xbf16>, vector<2x8x8xbf16>, vector<2x8x8xf32> -> vector<2x8x8xf32>
    "tpu.trace_stop"() : () -> ()
    %cst_40 = arith.constant 0.353553385 : f32
    %74 = vector.broadcast %cst_40 : f32 to vector<2x8x8xf32>
    %75 = arith.mulf %73, %74 : vector<2x8x8xf32>
    %76 = vector.shape_cast %14 : vector<2x8xf32> to vector<2x1x8xf32>
    %77 = vector.broadcast %76 : vector<2x1x8xf32> to vector<2x8x8xf32>
    %78 = arith.addf %75, %77 : vector<2x8x8xf32>
    %cst_41 = arith.constant dense<0xFF800000> : vector<2x8xf32>
    %79 = vector.multi_reduction <maximumf>, %78, %cst_41 [2] : vector<2x8x8xf32> to vector<2x8xf32>
    %80 = vector.shape_cast %79 : vector<2x8xf32> to vector<2x8x1xf32>
    %81 = vector.broadcast %80 : vector<2x8x1xf32> to vector<2x8x8xf32>
    %82 = arith.subf %78, %81 : vector<2x8x8xf32>
    %83 = math.exp %82 : vector<2x8x8xf32>
    %cst_42 = arith.constant dense<0.000000e+00> : vector<2x8xf32>
    %84 = vector.multi_reduction <add>, %83, %cst_42 [2] : vector<2x8x8xf32> to vector<2x8xf32>
    %85 = vector.shape_cast %84 : vector<2x8xf32> to vector<2x8x1xf32>
    %86 = tpu.reciprocal %85 {approx = true} : vector<2x8x1xf32> -> vector<2x8x1xf32>
    %87 = vector.broadcast %86 : vector<2x8x1xf32> to vector<2x8x8xf32>
    %88 = arith.mulf %83, %87 : vector<2x8x8xf32>
    %89 = arith.truncf %88 : vector<2x8x8xf32> to vector<2x8x8xbf16>
    "tpu.trace_start"() <{level = 10 : i32, message = "bqk,bkd->bqd"}> : () -> ()
    %cst_43 = arith.constant dense<0.000000e+00> : vector<2x8x8xf32>
    %90 = tpu.matmul %89, %72, %cst_43 {dimension_numbers = #tpu.dot_dimension_numbers<[2], [1], [1], [2], [0, 0, 0, 1, 1, 2], [0], [0]>} : vector<2x8x8xbf16>, vector<2x8x8xbf16>, vector<2x8x8xf32> -> vector<2x8x8xf32>
    "tpu.trace_stop"() : () -> ()
    %91 = vector.shape_cast %90 : vector<2x8x8xf32> to vector<16x8xf32>
    %92 = arith.truncf %91 : vector<16x8xf32> to vector<16x8xbf16>
    %93 = vector.extract_strided_slice %20 {offsets = [8, 0], sizes = [8, 32], strides = [1, 1]} : vector<32x32xbf16> to vector<8x32xbf16>
    %cst_44 = arith.constant dense<0.000000e+00> : vector<16x32xf32>
    %94 = tpu.matmul %92, %93, %cst_44 {dimension_numbers = #tpu.dot_dimension_numbers<[1], [0], [0], [1], [0, 0, 1, 1], [], []>} : vector<16x8xbf16>, vector<8x32xbf16>, vector<16x32xf32> -> vector<16x32xf32>
    %95 = arith.addf %66, %94 : vector<16x32xf32>
    %96 = vector.extract_strided_slice %35 {offsets = [0, 0, 16], sizes = [2, 8, 8], strides = [1, 1, 1]} : vector<2x8x96xf32> to vector<2x8x8xf32>
    %97 = arith.truncf %96 : vector<2x8x8xf32> to vector<2x8x8xbf16>
    %98 = vector.extract_strided_slice %35 {offsets = [0, 0, 48], sizes = [2, 8, 8], strides = [1, 1, 1]} : vector<2x8x96xf32> to vector<2x8x8xf32>
    %99 = arith.truncf %98 : vector<2x8x8xf32> to vector<2x8x8xbf16>
    %100 = vector.extract_strided_slice %35 {offsets = [0, 0, 80], sizes = [2, 8, 8], strides = [1, 1, 1]} : vector<2x8x96xf32> to vector<2x8x8xf32>
    %101 = arith.truncf %100 : vector<2x8x8xf32> to vector<2x8x8xbf16>
    "tpu.trace_start"() <{level = 10 : i32, message = "bqd,bkd->bqk"}> : () -> ()
    %cst_45 = arith.constant dense<0.000000e+00> : vector<2x8x8xf32>
    %102 = tpu.matmul %97, %99, %cst_45 {dimension_numbers = #tpu.dot_dimension_numbers<[2], [2], [1], [1], [0, 0, 0, 1, 1, 1], [0], [0]>} : vector<2x8x8xbf16>, vector<2x8x8xbf16>, vector<2x8x8xf32> -> vector<2x8x8xf32>
    "tpu.trace_stop"() : () -> ()
    %cst_46 = arith.constant 0.353553385 : f32
    %103 = vector.broadcast %cst_46 : f32 to vector<2x8x8xf32>
    %104 = arith.mulf %102, %103 : vector<2x8x8xf32>
    %105 = vector.shape_cast %14 : vector<2x8xf32> to vector<2x1x8xf32>
    %106 = vector.broadcast %105 : vector<2x1x8xf32> to vector<2x8x8xf32>
    %107 = arith.addf %104, %106 : vector<2x8x8xf32>
    %cst_47 = arith.constant dense<0xFF800000> : vector<2x8xf32>
    %108 = vector.multi_reduction <maximumf>, %107, %cst_47 [2] : vector<2x8x8xf32> to vector<2x8xf32>
    %109 = vector.shape_cast %108 : vector<2x8xf32> to vector<2x8x1xf32>
    %110 = vector.broadcast %109 : vector<2x8x1xf32> to vector<2x8x8xf32>
    %111 = arith.subf %107, %110 : vector<2x8x8xf32>
    %112 = math.exp %111 : vector<2x8x8xf32>
    %cst_48 = arith.constant dense<0.000000e+00> : vector<2x8xf32>
    %113 = vector.multi_reduction <add>, %112, %cst_48 [2] : vector<2x8x8xf32> to vector<2x8xf32>
    %114 = vector.shape_cast %113 : vector<2x8xf32> to vector<2x8x1xf32>
    %115 = tpu.reciprocal %114 {approx = true} : vector<2x8x1xf32> -> vector<2x8x1xf32>
    %116 = vector.broadcast %115 : vector<2x8x1xf32> to vector<2x8x8xf32>
    %117 = arith.mulf %112, %116 : vector<2x8x8xf32>
    %118 = arith.truncf %117 : vector<2x8x8xf32> to vector<2x8x8xbf16>
    "tpu.trace_start"() <{level = 10 : i32, message = "bqk,bkd->bqd"}> : () -> ()
    %cst_49 = arith.constant dense<0.000000e+00> : vector<2x8x8xf32>
    %119 = tpu.matmul %118, %101, %cst_49 {dimension_numbers = #tpu.dot_dimension_numbers<[2], [1], [1], [2], [0, 0, 0, 1, 1, 2], [0], [0]>} : vector<2x8x8xbf16>, vector<2x8x8xbf16>, vector<2x8x8xf32> -> vector<2x8x8xf32>
    "tpu.trace_stop"() : () -> ()
    %120 = vector.shape_cast %119 : vector<2x8x8xf32> to vector<16x8xf32>
    %121 = arith.truncf %120 : vector<16x8xf32> to vector<16x8xbf16>
    %122 = vector.extract_strided_slice %20 {offsets = [16, 0], sizes = [8, 32], strides = [1, 1]} : vector<32x32xbf16> to vector<8x32xbf16>
    %cst_50 = arith.constant dense<0.000000e+00> : vector<16x32xf32>
    %123 = tpu.matmul %121, %122, %cst_50 {dimension_numbers = #tpu.dot_dimension_numbers<[1], [0], [0], [1], [0, 0, 1, 1], [], []>} : vector<16x8xbf16>, vector<8x32xbf16>, vector<16x32xf32> -> vector<16x32xf32>
    %124 = arith.addf %95, %123 : vector<16x32xf32>
    %125 = vector.extract_strided_slice %35 {offsets = [0, 0, 24], sizes = [2, 8, 8], strides = [1, 1, 1]} : vector<2x8x96xf32> to vector<2x8x8xf32>
    %126 = arith.truncf %125 : vector<2x8x8xf32> to vector<2x8x8xbf16>
    %127 = vector.extract_strided_slice %35 {offsets = [0, 0, 56], sizes = [2, 8, 8], strides = [1, 1, 1]} : vector<2x8x96xf32> to vector<2x8x8xf32>
    %128 = arith.truncf %127 : vector<2x8x8xf32> to vector<2x8x8xbf16>
    %129 = vector.extract_strided_slice %35 {offsets = [0, 0, 88], sizes = [2, 8, 8], strides = [1, 1, 1]} : vector<2x8x96xf32> to vector<2x8x8xf32>
    %130 = arith.truncf %129 : vector<2x8x8xf32> to vector<2x8x8xbf16>
    "tpu.trace_start"() <{level = 10 : i32, message = "bqd,bkd->bqk"}> : () -> ()
    %cst_51 = arith.constant dense<0.000000e+00> : vector<2x8x8xf32>
    %131 = tpu.matmul %126, %128, %cst_51 {dimension_numbers = #tpu.dot_dimension_numbers<[2], [2], [1], [1], [0, 0, 0, 1, 1, 1], [0], [0]>} : vector<2x8x8xbf16>, vector<2x8x8xbf16>, vector<2x8x8xf32> -> vector<2x8x8xf32>
    "tpu.trace_stop"() : () -> ()
    %cst_52 = arith.constant 0.353553385 : f32
    %132 = vector.broadcast %cst_52 : f32 to vector<2x8x8xf32>
    %133 = arith.mulf %131, %132 : vector<2x8x8xf32>
    %134 = vector.shape_cast %14 : vector<2x8xf32> to vector<2x1x8xf32>
    %135 = vector.broadcast %134 : vector<2x1x8xf32> to vector<2x8x8xf32>
    %136 = arith.addf %133, %135 : vector<2x8x8xf32>
    %cst_53 = arith.constant dense<0xFF800000> : vector<2x8xf32>
    %137 = vector.multi_reduction <maximumf>, %136, %cst_53 [2] : vector<2x8x8xf32> to vector<2x8xf32>
    %138 = vector.shape_cast %137 : vector<2x8xf32> to vector<2x8x1xf32>
    %139 = vector.broadcast %138 : vector<2x8x1xf32> to vector<2x8x8xf32>
    %140 = arith.subf %136, %139 : vector<2x8x8xf32>
    %141 = math.exp %140 : vector<2x8x8xf32>
    %cst_54 = arith.constant dense<0.000000e+00> : vector<2x8xf32>
    %142 = vector.multi_reduction <add>, %141, %cst_54 [2] : vector<2x8x8xf32> to vector<2x8xf32>
    %143 = vector.shape_cast %142 : vector<2x8xf32> to vector<2x8x1xf32>
    %144 = tpu.reciprocal %143 {approx = true} : vector<2x8x1xf32> -> vector<2x8x1xf32>
    %145 = vector.broadcast %144 : vector<2x8x1xf32> to vector<2x8x8xf32>
    %146 = arith.mulf %141, %145 : vector<2x8x8xf32>
    %147 = arith.truncf %146 : vector<2x8x8xf32> to vector<2x8x8xbf16>
    "tpu.trace_start"() <{level = 10 : i32, message = "bqk,bkd->bqd"}> : () -> ()
    %cst_55 = arith.constant dense<0.000000e+00> : vector<2x8x8xf32>
    %148 = tpu.matmul %147, %130, %cst_55 {dimension_numbers = #tpu.dot_dimension_numbers<[2], [1], [1], [2], [0, 0, 0, 1, 1, 2], [0], [0]>} : vector<2x8x8xbf16>, vector<2x8x8xbf16>, vector<2x8x8xf32> -> vector<2x8x8xf32>
    "tpu.trace_stop"() : () -> ()
    %149 = vector.shape_cast %148 : vector<2x8x8xf32> to vector<16x8xf32>
    %150 = arith.truncf %149 : vector<16x8xf32> to vector<16x8xbf16>
    %151 = vector.extract_strided_slice %20 {offsets = [24, 0], sizes = [8, 32], strides = [1, 1]} : vector<32x32xbf16> to vector<8x32xbf16>
    %cst_56 = arith.constant dense<0.000000e+00> : vector<16x32xf32>
    %152 = tpu.matmul %150, %151, %cst_56 {dimension_numbers = #tpu.dot_dimension_numbers<[1], [0], [0], [1], [0, 0, 1, 1], [], []>} : vector<16x8xbf16>, vector<8x32xbf16>, vector<16x32xf32> -> vector<16x32xf32>
    %153 = arith.addf %124, %152 : vector<16x32xf32>
    %154 = arith.addf %8, %153 : vector<16x32xf32>
    %c0_57 = arith.constant 0 : index
    %c0_58 = arith.constant 0 : index
    %c0_59 = arith.constant 0 : index
    %155 = vector.load %arg7[%c0_57, %c0_58, %c0_59] : memref<2x1x32xf32, #tpu.memory_space<vmem>>, vector<1x1x32xf32>
    %156 = vector.shape_cast %155 : vector<1x1x32xf32> to vector<1x32xf32>
    %c0_60 = arith.constant 0 : index
    %c0_61 = arith.constant 0 : index
    %c0_62 = arith.constant 0 : index
    %157 = vector.load %arg8[%c0_60, %c0_61, %c0_62] : memref<2x1x32xf32, #tpu.memory_space<vmem>>, vector<1x1x32xf32>
    %158 = vector.shape_cast %157 : vector<1x1x32xf32> to vector<1x32xf32>
    %cst_63 = arith.constant dense<0.000000e+00> : vector<16xf32>
    %159 = vector.multi_reduction <add>, %154, %cst_63 [1] : vector<16x32xf32> to vector<16xf32>
    %160 = vector.shape_cast %159 : vector<16xf32> to vector<16x1xf32>
    %cst_64 = arith.constant 3.200000e+01 : f32
    %161 = vector.broadcast %cst_64 : f32 to vector<16x1xf32>
    %162 = arith.divf %160, %161 : vector<16x1xf32>
    %163 = vector.broadcast %162 : vector<16x1xf32> to vector<16x32xf32>
    %164 = arith.subf %154, %163 : vector<16x32xf32>
    %165 = arith.mulf %164, %164 : vector<16x32xf32>
    %cst_65 = arith.constant dense<0.000000e+00> : vector<16xf32>
    %166 = vector.multi_reduction <add>, %165, %cst_65 [1] : vector<16x32xf32> to vector<16xf32>
    %167 = vector.shape_cast %166 : vector<16xf32> to vector<16x1xf32>
    %cst_66 = arith.constant 3.200000e+01 : f32
    %168 = vector.broadcast %cst_66 : f32 to vector<16x1xf32>
    %169 = arith.divf %167, %168 : vector<16x1xf32>
    %170 = vector.broadcast %162 : vector<16x1xf32> to vector<16x32xf32>
    %171 = arith.subf %154, %170 : vector<16x32xf32>
    %cst_67 = arith.constant 9.99999974E-6 : f32
    %172 = vector.broadcast %cst_67 : f32 to vector<16x1xf32>
    %173 = arith.addf %169, %172 : vector<16x1xf32>
    %174 = math.rsqrt %173 : vector<16x1xf32>
    %175 = vector.broadcast %174 : vector<16x1xf32> to vector<16x32xf32>
    %176 = arith.mulf %171, %175 : vector<16x32xf32>
    %177 = vector.broadcast %156 : vector<1x32xf32> to vector<16x32xf32>
    %178 = arith.mulf %176, %177 : vector<16x32xf32>
    %179 = vector.broadcast %158 : vector<1x32xf32> to vector<16x32xf32>
    %180 = arith.addf %178, %179 : vector<16x32xf32>
    %181 = arith.truncf %180 : vector<16x32xf32> to vector<16x32xbf16>
    %cst_68 = arith.constant dense<0.000000e+00> : vector<16x64xf32>
    %182 = tpu.matmul %181, %24, %cst_68 {dimension_numbers = #tpu.dot_dimension_numbers<[1], [0], [0], [1], [0, 0, 1, 1], [], []>} : vector<16x32xbf16>, vector<32x64xbf16>, vector<16x64xf32> -> vector<16x64xf32>
    %183 = vector.broadcast %26 : vector<1x64xf32> to vector<16x64xf32>
    %184 = arith.addf %182, %183 : vector<16x64xf32>
    %cst_69 = arith.constant 0.000000e+00 : f32
    %185 = vector.broadcast %cst_69 : f32 to vector<16x64xf32>
    %186 = arith.maximumf %184, %185 : vector<16x64xf32>
    %187 = arith.truncf %186 : vector<16x64xf32> to vector<16x64xbf16>
    %cst_70 = arith.constant dense<0.000000e+00> : vector<16x32xf32>
    %188 = tpu.matmul %187, %28, %cst_70 {dimension_numbers = #tpu.dot_dimension_numbers<[1], [0], [0], [1], [0, 0, 1, 1], [], []>} : vector<16x64xbf16>, vector<64x32xbf16>, vector<16x32xf32> -> vector<16x32xf32>
    %189 = vector.broadcast %30 : vector<1x32xf32> to vector<16x32xf32>
    %190 = arith.addf %188, %189 : vector<16x32xf32>
    %191 = arith.addf %180, %190 : vector<16x32xf32>
    %c0_71 = arith.constant 0 : index
    %c0_72 = arith.constant 0 : index
    %c0_73 = arith.constant 0 : index
    %192 = vector.load %arg13[%c0_71, %c0_72, %c0_73] : memref<2x1x32xf32, #tpu.memory_space<vmem>>, vector<1x1x32xf32>
    %193 = vector.shape_cast %192 : vector<1x1x32xf32> to vector<1x32xf32>
    %c0_74 = arith.constant 0 : index
    %c0_75 = arith.constant 0 : index
    %c0_76 = arith.constant 0 : index
    %194 = vector.load %arg14[%c0_74, %c0_75, %c0_76] : memref<2x1x32xf32, #tpu.memory_space<vmem>>, vector<1x1x32xf32>
    %195 = vector.shape_cast %194 : vector<1x1x32xf32> to vector<1x32xf32>
    %cst_77 = arith.constant dense<0.000000e+00> : vector<16xf32>
    %196 = vector.multi_reduction <add>, %191, %cst_77 [1] : vector<16x32xf32> to vector<16xf32>
    %197 = vector.shape_cast %196 : vector<16xf32> to vector<16x1xf32>
    %cst_78 = arith.constant 3.200000e+01 : f32
    %198 = vector.broadcast %cst_78 : f32 to vector<16x1xf32>
    %199 = arith.divf %197, %198 : vector<16x1xf32>
    %200 = vector.broadcast %199 : vector<16x1xf32> to vector<16x32xf32>
    %201 = arith.subf %191, %200 : vector<16x32xf32>
    %202 = arith.mulf %201, %201 : vector<16x32xf32>
    %cst_79 = arith.constant dense<0.000000e+00> : vector<16xf32>
    %203 = vector.multi_reduction <add>, %202, %cst_79 [1] : vector<16x32xf32> to vector<16xf32>
    %204 = vector.shape_cast %203 : vector<16xf32> to vector<16x1xf32>
    %cst_80 = arith.constant 3.200000e+01 : f32
    %205 = vector.broadcast %cst_80 : f32 to vector<16x1xf32>
    %206 = arith.divf %204, %205 : vector<16x1xf32>
    %207 = vector.broadcast %199 : vector<16x1xf32> to vector<16x32xf32>
    %208 = arith.subf %191, %207 : vector<16x32xf32>
    %cst_81 = arith.constant 9.99999974E-6 : f32
    %209 = vector.broadcast %cst_81 : f32 to vector<16x1xf32>
    %210 = arith.addf %206, %209 : vector<16x1xf32>
    %211 = math.rsqrt %210 : vector<16x1xf32>
    %212 = vector.broadcast %211 : vector<16x1xf32> to vector<16x32xf32>
    %213 = arith.mulf %208, %212 : vector<16x32xf32>
    %214 = vector.broadcast %193 : vector<1x32xf32> to vector<16x32xf32>
    %215 = arith.mulf %213, %214 : vector<16x32xf32>
    %216 = vector.broadcast %195 : vector<1x32xf32> to vector<16x32xf32>
    %217 = arith.addf %215, %216 : vector<16x32xf32>
    %c1 = arith.constant 1 : index
    %c0_82 = arith.constant 0 : index
    %c0_83 = arith.constant 0 : index
    %218 = vector.load %arg3[%c1, %c0_82, %c0_83] : memref<2x32x96xbf16, #tpu.memory_space<vmem>>, vector<1x32x96xbf16>
    %219 = vector.shape_cast %218 : vector<1x32x96xbf16> to vector<32x96xbf16>
    %c1_84 = arith.constant 1 : index
    %c0_85 = arith.constant 0 : index
    %c0_86 = arith.constant 0 : index
    %220 = vector.load %arg4[%c1_84, %c0_85, %c0_86] : memref<2x1x96xf32, #tpu.memory_space<vmem>>, vector<1x1x96xf32>
    %221 = vector.shape_cast %220 : vector<1x1x96xf32> to vector<1x96xf32>
    %c1_87 = arith.constant 1 : index
    %c0_88 = arith.constant 0 : index
    %c0_89 = arith.constant 0 : index
    %222 = vector.load %arg5[%c1_87, %c0_88, %c0_89] : memref<2x32x32xbf16, #tpu.memory_space<vmem>>, vector<1x32x32xbf16>
    %223 = vector.shape_cast %222 : vector<1x32x32xbf16> to vector<32x32xbf16>
    %c1_90 = arith.constant 1 : index
    %c0_91 = arith.constant 0 : index
    %c0_92 = arith.constant 0 : index
    %224 = vector.load %arg6[%c1_90, %c0_91, %c0_92] : memref<2x1x32xf32, #tpu.memory_space<vmem>>, vector<1x1x32xf32>
    %225 = vector.shape_cast %224 : vector<1x1x32xf32> to vector<1x32xf32>
    %c1_93 = arith.constant 1 : index
    %c0_94 = arith.constant 0 : index
    %c0_95 = arith.constant 0 : index
    %226 = vector.load %arg9[%c1_93, %c0_94, %c0_95] : memref<2x32x64xbf16, #tpu.memory_space<vmem>>, vector<1x32x64xbf16>
    %227 = vector.shape_cast %226 : vector<1x32x64xbf16> to vector<32x64xbf16>
    %c1_96 = arith.constant 1 : index
    %c0_97 = arith.constant 0 : index
    %c0_98 = arith.constant 0 : index
    %228 = vector.load %arg10[%c1_96, %c0_97, %c0_98] : memref<2x1x64xf32, #tpu.memory_space<vmem>>, vector<1x1x64xf32>
    %229 = vector.shape_cast %228 : vector<1x1x64xf32> to vector<1x64xf32>
    %c1_99 = arith.constant 1 : index
    %c0_100 = arith.constant 0 : index
    %c0_101 = arith.constant 0 : index
    %230 = vector.load %arg11[%c1_99, %c0_100, %c0_101] : memref<2x64x32xbf16, #tpu.memory_space<vmem>>, vector<1x64x32xbf16>
    %231 = vector.shape_cast %230 : vector<1x64x32xbf16> to vector<64x32xbf16>
    %c1_102 = arith.constant 1 : index
    %c0_103 = arith.constant 0 : index
    %c0_104 = arith.constant 0 : index
    %232 = vector.load %arg12[%c1_102, %c0_103, %c0_104] : memref<2x1x32xf32, #tpu.memory_space<vmem>>, vector<1x1x32xf32>
    %233 = vector.shape_cast %232 : vector<1x1x32xf32> to vector<1x32xf32>
    %234 = arith.truncf %217 : vector<16x32xf32> to vector<16x32xbf16>
    %cst_105 = arith.constant dense<0.000000e+00> : vector<16x96xf32>
    %235 = tpu.matmul %234, %219, %cst_105 {dimension_numbers = #tpu.dot_dimension_numbers<[1], [0], [0], [1], [0, 0, 1, 1], [], []>} : vector<16x32xbf16>, vector<32x96xbf16>, vector<16x96xf32> -> vector<16x96xf32>
    %236 = vector.broadcast %221 : vector<1x96xf32> to vector<16x96xf32>
    %237 = arith.addf %235, %236 : vector<16x96xf32>
    %238 = vector.shape_cast %237 : vector<16x96xf32> to vector<2x8x96xf32>
    %239 = vector.shape_cast %225 : vector<1x32xf32> to vector<1x32xf32>
    %240 = vector.broadcast %239 : vector<1x32xf32> to vector<16x32xf32>
    %241 = vector.extract_strided_slice %238 {offsets = [0, 0, 0], sizes = [2, 8, 8], strides = [1, 1, 1]} : vector<2x8x96xf32> to vector<2x8x8xf32>
    %242 = arith.truncf %241 : vector<2x8x8xf32> to vector<2x8x8xbf16>
    %243 = vector.extract_strided_slice %238 {offsets = [0, 0, 32], sizes = [2, 8, 8], strides = [1, 1, 1]} : vector<2x8x96xf32> to vector<2x8x8xf32>
    %244 = arith.truncf %243 : vector<2x8x8xf32> to vector<2x8x8xbf16>
    %245 = vector.extract_strided_slice %238 {offsets = [0, 0, 64], sizes = [2, 8, 8], strides = [1, 1, 1]} : vector<2x8x96xf32> to vector<2x8x8xf32>
    %246 = arith.truncf %245 : vector<2x8x8xf32> to vector<2x8x8xbf16>
    "tpu.trace_start"() <{level = 10 : i32, message = "bqd,bkd->bqk"}> : () -> ()
    %cst_106 = arith.constant dense<0.000000e+00> : vector<2x8x8xf32>
    %247 = tpu.matmul %242, %244, %cst_106 {dimension_numbers = #tpu.dot_dimension_numbers<[2], [2], [1], [1], [0, 0, 0, 1, 1, 1], [0], [0]>} : vector<2x8x8xbf16>, vector<2x8x8xbf16>, vector<2x8x8xf32> -> vector<2x8x8xf32>
    "tpu.trace_stop"() : () -> ()
    %cst_107 = arith.constant 0.353553385 : f32
    %248 = vector.broadcast %cst_107 : f32 to vector<2x8x8xf32>
    %249 = arith.mulf %247, %248 : vector<2x8x8xf32>
    %250 = vector.shape_cast %14 : vector<2x8xf32> to vector<2x1x8xf32>
    %251 = vector.broadcast %250 : vector<2x1x8xf32> to vector<2x8x8xf32>
    %252 = arith.addf %249, %251 : vector<2x8x8xf32>
    %cst_108 = arith.constant dense<0xFF800000> : vector<2x8xf32>
    %253 = vector.multi_reduction <maximumf>, %252, %cst_108 [2] : vector<2x8x8xf32> to vector<2x8xf32>
    %254 = vector.shape_cast %253 : vector<2x8xf32> to vector<2x8x1xf32>
    %255 = vector.broadcast %254 : vector<2x8x1xf32> to vector<2x8x8xf32>
    %256 = arith.subf %252, %255 : vector<2x8x8xf32>
    %257 = math.exp %256 : vector<2x8x8xf32>
    %cst_109 = arith.constant dense<0.000000e+00> : vector<2x8xf32>
    %258 = vector.multi_reduction <add>, %257, %cst_109 [2] : vector<2x8x8xf32> to vector<2x8xf32>
    %259 = vector.shape_cast %258 : vector<2x8xf32> to vector<2x8x1xf32>
    %260 = tpu.reciprocal %259 {approx = true} : vector<2x8x1xf32> -> vector<2x8x1xf32>
    %261 = vector.broadcast %260 : vector<2x8x1xf32> to vector<2x8x8xf32>
    %262 = arith.mulf %257, %261 : vector<2x8x8xf32>
    %263 = arith.truncf %262 : vector<2x8x8xf32> to vector<2x8x8xbf16>
    "tpu.trace_start"() <{level = 10 : i32, message = "bqk,bkd->bqd"}> : () -> ()
    %cst_110 = arith.constant dense<0.000000e+00> : vector<2x8x8xf32>
    %264 = tpu.matmul %263, %246, %cst_110 {dimension_numbers = #tpu.dot_dimension_numbers<[2], [1], [1], [2], [0, 0, 0, 1, 1, 2], [0], [0]>} : vector<2x8x8xbf16>, vector<2x8x8xbf16>, vector<2x8x8xf32> -> vector<2x8x8xf32>
    "tpu.trace_stop"() : () -> ()
    %265 = vector.shape_cast %264 : vector<2x8x8xf32> to vector<16x8xf32>
    %266 = arith.truncf %265 : vector<16x8xf32> to vector<16x8xbf16>
    %267 = vector.extract_strided_slice %223 {offsets = [0, 0], sizes = [8, 32], strides = [1, 1]} : vector<32x32xbf16> to vector<8x32xbf16>
    %cst_111 = arith.constant dense<0.000000e+00> : vector<16x32xf32>
    %268 = tpu.matmul %266, %267, %cst_111 {dimension_numbers = #tpu.dot_dimension_numbers<[1], [0], [0], [1], [0, 0, 1, 1], [], []>} : vector<16x8xbf16>, vector<8x32xbf16>, vector<16x32xf32> -> vector<16x32xf32>
    %269 = arith.addf %240, %268 : vector<16x32xf32>
    %270 = vector.extract_strided_slice %238 {offsets = [0, 0, 8], sizes = [2, 8, 8], strides = [1, 1, 1]} : vector<2x8x96xf32> to vector<2x8x8xf32>
    %271 = arith.truncf %270 : vector<2x8x8xf32> to vector<2x8x8xbf16>
    %272 = vector.extract_strided_slice %238 {offsets = [0, 0, 40], sizes = [2, 8, 8], strides = [1, 1, 1]} : vector<2x8x96xf32> to vector<2x8x8xf32>
    %273 = arith.truncf %272 : vector<2x8x8xf32> to vector<2x8x8xbf16>
    %274 = vector.extract_strided_slice %238 {offsets = [0, 0, 72], sizes = [2, 8, 8], strides = [1, 1, 1]} : vector<2x8x96xf32> to vector<2x8x8xf32>
    %275 = arith.truncf %274 : vector<2x8x8xf32> to vector<2x8x8xbf16>
    "tpu.trace_start"() <{level = 10 : i32, message = "bqd,bkd->bqk"}> : () -> ()
    %cst_112 = arith.constant dense<0.000000e+00> : vector<2x8x8xf32>
    %276 = tpu.matmul %271, %273, %cst_112 {dimension_numbers = #tpu.dot_dimension_numbers<[2], [2], [1], [1], [0, 0, 0, 1, 1, 1], [0], [0]>} : vector<2x8x8xbf16>, vector<2x8x8xbf16>, vector<2x8x8xf32> -> vector<2x8x8xf32>
    "tpu.trace_stop"() : () -> ()
    %cst_113 = arith.constant 0.353553385 : f32
    %277 = vector.broadcast %cst_113 : f32 to vector<2x8x8xf32>
    %278 = arith.mulf %276, %277 : vector<2x8x8xf32>
    %279 = vector.shape_cast %14 : vector<2x8xf32> to vector<2x1x8xf32>
    %280 = vector.broadcast %279 : vector<2x1x8xf32> to vector<2x8x8xf32>
    %281 = arith.addf %278, %280 : vector<2x8x8xf32>
    %cst_114 = arith.constant dense<0xFF800000> : vector<2x8xf32>
    %282 = vector.multi_reduction <maximumf>, %281, %cst_114 [2] : vector<2x8x8xf32> to vector<2x8xf32>
    %283 = vector.shape_cast %282 : vector<2x8xf32> to vector<2x8x1xf32>
    %284 = vector.broadcast %283 : vector<2x8x1xf32> to vector<2x8x8xf32>
    %285 = arith.subf %281, %284 : vector<2x8x8xf32>
    %286 = math.exp %285 : vector<2x8x8xf32>
    %cst_115 = arith.constant dense<0.000000e+00> : vector<2x8xf32>
    %287 = vector.multi_reduction <add>, %286, %cst_115 [2] : vector<2x8x8xf32> to vector<2x8xf32>
    %288 = vector.shape_cast %287 : vector<2x8xf32> to vector<2x8x1xf32>
    %289 = tpu.reciprocal %288 {approx = true} : vector<2x8x1xf32> -> vector<2x8x1xf32>
    %290 = vector.broadcast %289 : vector<2x8x1xf32> to vector<2x8x8xf32>
    %291 = arith.mulf %286, %290 : vector<2x8x8xf32>
    %292 = arith.truncf %291 : vector<2x8x8xf32> to vector<2x8x8xbf16>
    "tpu.trace_start"() <{level = 10 : i32, message = "bqk,bkd->bqd"}> : () -> ()
    %cst_116 = arith.constant dense<0.000000e+00> : vector<2x8x8xf32>
    %293 = tpu.matmul %292, %275, %cst_116 {dimension_numbers = #tpu.dot_dimension_numbers<[2], [1], [1], [2], [0, 0, 0, 1, 1, 2], [0], [0]>} : vector<2x8x8xbf16>, vector<2x8x8xbf16>, vector<2x8x8xf32> -> vector<2x8x8xf32>
    "tpu.trace_stop"() : () -> ()
    %294 = vector.shape_cast %293 : vector<2x8x8xf32> to vector<16x8xf32>
    %295 = arith.truncf %294 : vector<16x8xf32> to vector<16x8xbf16>
    %296 = vector.extract_strided_slice %223 {offsets = [8, 0], sizes = [8, 32], strides = [1, 1]} : vector<32x32xbf16> to vector<8x32xbf16>
    %cst_117 = arith.constant dense<0.000000e+00> : vector<16x32xf32>
    %297 = tpu.matmul %295, %296, %cst_117 {dimension_numbers = #tpu.dot_dimension_numbers<[1], [0], [0], [1], [0, 0, 1, 1], [], []>} : vector<16x8xbf16>, vector<8x32xbf16>, vector<16x32xf32> -> vector<16x32xf32>
    %298 = arith.addf %269, %297 : vector<16x32xf32>
    %299 = vector.extract_strided_slice %238 {offsets = [0, 0, 16], sizes = [2, 8, 8], strides = [1, 1, 1]} : vector<2x8x96xf32> to vector<2x8x8xf32>
    %300 = arith.truncf %299 : vector<2x8x8xf32> to vector<2x8x8xbf16>
    %301 = vector.extract_strided_slice %238 {offsets = [0, 0, 48], sizes = [2, 8, 8], strides = [1, 1, 1]} : vector<2x8x96xf32> to vector<2x8x8xf32>
    %302 = arith.truncf %301 : vector<2x8x8xf32> to vector<2x8x8xbf16>
    %303 = vector.extract_strided_slice %238 {offsets = [0, 0, 80], sizes = [2, 8, 8], strides = [1, 1, 1]} : vector<2x8x96xf32> to vector<2x8x8xf32>
    %304 = arith.truncf %303 : vector<2x8x8xf32> to vector<2x8x8xbf16>
    "tpu.trace_start"() <{level = 10 : i32, message = "bqd,bkd->bqk"}> : () -> ()
    %cst_118 = arith.constant dense<0.000000e+00> : vector<2x8x8xf32>
    %305 = tpu.matmul %300, %302, %cst_118 {dimension_numbers = #tpu.dot_dimension_numbers<[2], [2], [1], [1], [0, 0, 0, 1, 1, 1], [0], [0]>} : vector<2x8x8xbf16>, vector<2x8x8xbf16>, vector<2x8x8xf32> -> vector<2x8x8xf32>
    "tpu.trace_stop"() : () -> ()
    %cst_119 = arith.constant 0.353553385 : f32
    %306 = vector.broadcast %cst_119 : f32 to vector<2x8x8xf32>
    %307 = arith.mulf %305, %306 : vector<2x8x8xf32>
    %308 = vector.shape_cast %14 : vector<2x8xf32> to vector<2x1x8xf32>
    %309 = vector.broadcast %308 : vector<2x1x8xf32> to vector<2x8x8xf32>
    %310 = arith.addf %307, %309 : vector<2x8x8xf32>
    %cst_120 = arith.constant dense<0xFF800000> : vector<2x8xf32>
    %311 = vector.multi_reduction <maximumf>, %310, %cst_120 [2] : vector<2x8x8xf32> to vector<2x8xf32>
    %312 = vector.shape_cast %311 : vector<2x8xf32> to vector<2x8x1xf32>
    %313 = vector.broadcast %312 : vector<2x8x1xf32> to vector<2x8x8xf32>
    %314 = arith.subf %310, %313 : vector<2x8x8xf32>
    %315 = math.exp %314 : vector<2x8x8xf32>
    %cst_121 = arith.constant dense<0.000000e+00> : vector<2x8xf32>
    %316 = vector.multi_reduction <add>, %315, %cst_121 [2] : vector<2x8x8xf32> to vector<2x8xf32>
    %317 = vector.shape_cast %316 : vector<2x8xf32> to vector<2x8x1xf32>
    %318 = tpu.reciprocal %317 {approx = true} : vector<2x8x1xf32> -> vector<2x8x1xf32>
    %319 = vector.broadcast %318 : vector<2x8x1xf32> to vector<2x8x8xf32>
    %320 = arith.mulf %315, %319 : vector<2x8x8xf32>
    %321 = arith.truncf %320 : vector<2x8x8xf32> to vector<2x8x8xbf16>
    "tpu.trace_start"() <{level = 10 : i32, message = "bqk,bkd->bqd"}> : () -> ()
    %cst_122 = arith.constant dense<0.000000e+00> : vector<2x8x8xf32>
    %322 = tpu.matmul %321, %304, %cst_122 {dimension_numbers = #tpu.dot_dimension_numbers<[2], [1], [1], [2], [0, 0, 0, 1, 1, 2], [0], [0]>} : vector<2x8x8xbf16>, vector<2x8x8xbf16>, vector<2x8x8xf32> -> vector<2x8x8xf32>
    "tpu.trace_stop"() : () -> ()
    %323 = vector.shape_cast %322 : vector<2x8x8xf32> to vector<16x8xf32>
    %324 = arith.truncf %323 : vector<16x8xf32> to vector<16x8xbf16>
    %325 = vector.extract_strided_slice %223 {offsets = [16, 0], sizes = [8, 32], strides = [1, 1]} : vector<32x32xbf16> to vector<8x32xbf16>
    %cst_123 = arith.constant dense<0.000000e+00> : vector<16x32xf32>
    %326 = tpu.matmul %324, %325, %cst_123 {dimension_numbers = #tpu.dot_dimension_numbers<[1], [0], [0], [1], [0, 0, 1, 1], [], []>} : vector<16x8xbf16>, vector<8x32xbf16>, vector<16x32xf32> -> vector<16x32xf32>
    %327 = arith.addf %298, %326 : vector<16x32xf32>
    %328 = vector.extract_strided_slice %238 {offsets = [0, 0, 24], sizes = [2, 8, 8], strides = [1, 1, 1]} : vector<2x8x96xf32> to vector<2x8x8xf32>
    %329 = arith.truncf %328 : vector<2x8x8xf32> to vector<2x8x8xbf16>
    %330 = vector.extract_strided_slice %238 {offsets = [0, 0, 56], sizes = [2, 8, 8], strides = [1, 1, 1]} : vector<2x8x96xf32> to vector<2x8x8xf32>
    %331 = arith.truncf %330 : vector<2x8x8xf32> to vector<2x8x8xbf16>
    %332 = vector.extract_strided_slice %238 {offsets = [0, 0, 88], sizes = [2, 8, 8], strides = [1, 1, 1]} : vector<2x8x96xf32> to vector<2x8x8xf32>
    %333 = arith.truncf %332 : vector<2x8x8xf32> to vector<2x8x8xbf16>
    "tpu.trace_start"() <{level = 10 : i32, message = "bqd,bkd->bqk"}> : () -> ()
    %cst_124 = arith.constant dense<0.000000e+00> : vector<2x8x8xf32>
    %334 = tpu.matmul %329, %331, %cst_124 {dimension_numbers = #tpu.dot_dimension_numbers<[2], [2], [1], [1], [0, 0, 0, 1, 1, 1], [0], [0]>} : vector<2x8x8xbf16>, vector<2x8x8xbf16>, vector<2x8x8xf32> -> vector<2x8x8xf32>
    "tpu.trace_stop"() : () -> ()
    %cst_125 = arith.constant 0.353553385 : f32
    %335 = vector.broadcast %cst_125 : f32 to vector<2x8x8xf32>
    %336 = arith.mulf %334, %335 : vector<2x8x8xf32>
    %337 = vector.shape_cast %14 : vector<2x8xf32> to vector<2x1x8xf32>
    %338 = vector.broadcast %337 : vector<2x1x8xf32> to vector<2x8x8xf32>
    %339 = arith.addf %336, %338 : vector<2x8x8xf32>
    %cst_126 = arith.constant dense<0xFF800000> : vector<2x8xf32>
    %340 = vector.multi_reduction <maximumf>, %339, %cst_126 [2] : vector<2x8x8xf32> to vector<2x8xf32>
    %341 = vector.shape_cast %340 : vector<2x8xf32> to vector<2x8x1xf32>
    %342 = vector.broadcast %341 : vector<2x8x1xf32> to vector<2x8x8xf32>
    %343 = arith.subf %339, %342 : vector<2x8x8xf32>
    %344 = math.exp %343 : vector<2x8x8xf32>
    %cst_127 = arith.constant dense<0.000000e+00> : vector<2x8xf32>
    %345 = vector.multi_reduction <add>, %344, %cst_127 [2] : vector<2x8x8xf32> to vector<2x8xf32>
    %346 = vector.shape_cast %345 : vector<2x8xf32> to vector<2x8x1xf32>
    %347 = tpu.reciprocal %346 {approx = true} : vector<2x8x1xf32> -> vector<2x8x1xf32>
    %348 = vector.broadcast %347 : vector<2x8x1xf32> to vector<2x8x8xf32>
    %349 = arith.mulf %344, %348 : vector<2x8x8xf32>
    %350 = arith.truncf %349 : vector<2x8x8xf32> to vector<2x8x8xbf16>
    "tpu.trace_start"() <{level = 10 : i32, message = "bqk,bkd->bqd"}> : () -> ()
    %cst_128 = arith.constant dense<0.000000e+00> : vector<2x8x8xf32>
    %351 = tpu.matmul %350, %333, %cst_128 {dimension_numbers = #tpu.dot_dimension_numbers<[2], [1], [1], [2], [0, 0, 0, 1, 1, 2], [0], [0]>} : vector<2x8x8xbf16>, vector<2x8x8xbf16>, vector<2x8x8xf32> -> vector<2x8x8xf32>
    "tpu.trace_stop"() : () -> ()
    %352 = vector.shape_cast %351 : vector<2x8x8xf32> to vector<16x8xf32>
    %353 = arith.truncf %352 : vector<16x8xf32> to vector<16x8xbf16>
    %354 = vector.extract_strided_slice %223 {offsets = [24, 0], sizes = [8, 32], strides = [1, 1]} : vector<32x32xbf16> to vector<8x32xbf16>
    %cst_129 = arith.constant dense<0.000000e+00> : vector<16x32xf32>
    %355 = tpu.matmul %353, %354, %cst_129 {dimension_numbers = #tpu.dot_dimension_numbers<[1], [0], [0], [1], [0, 0, 1, 1], [], []>} : vector<16x8xbf16>, vector<8x32xbf16>, vector<16x32xf32> -> vector<16x32xf32>
    %356 = arith.addf %327, %355 : vector<16x32xf32>
    %357 = arith.addf %217, %356 : vector<16x32xf32>
    %c1_130 = arith.constant 1 : index
    %c0_131 = arith.constant 0 : index
    %c0_132 = arith.constant 0 : index
    %358 = vector.load %arg7[%c1_130, %c0_131, %c0_132] : memref<2x1x32xf32, #tpu.memory_space<vmem>>, vector<1x1x32xf32>
    %359 = vector.shape_cast %358 : vector<1x1x32xf32> to vector<1x32xf32>
    %c1_133 = arith.constant 1 : index
    %c0_134 = arith.constant 0 : index
    %c0_135 = arith.constant 0 : index
    %360 = vector.load %arg8[%c1_133, %c0_134, %c0_135] : memref<2x1x32xf32, #tpu.memory_space<vmem>>, vector<1x1x32xf32>
    %361 = vector.shape_cast %360 : vector<1x1x32xf32> to vector<1x32xf32>
    %cst_136 = arith.constant dense<0.000000e+00> : vector<16xf32>
    %362 = vector.multi_reduction <add>, %357, %cst_136 [1] : vector<16x32xf32> to vector<16xf32>
    %363 = vector.shape_cast %362 : vector<16xf32> to vector<16x1xf32>
    %cst_137 = arith.constant 3.200000e+01 : f32
    %364 = vector.broadcast %cst_137 : f32 to vector<16x1xf32>
    %365 = arith.divf %363, %364 : vector<16x1xf32>
    %366 = vector.broadcast %365 : vector<16x1xf32> to vector<16x32xf32>
    %367 = arith.subf %357, %366 : vector<16x32xf32>
    %368 = arith.mulf %367, %367 : vector<16x32xf32>
    %cst_138 = arith.constant dense<0.000000e+00> : vector<16xf32>
    %369 = vector.multi_reduction <add>, %368, %cst_138 [1] : vector<16x32xf32> to vector<16xf32>
    %370 = vector.shape_cast %369 : vector<16xf32> to vector<16x1xf32>
    %cst_139 = arith.constant 3.200000e+01 : f32
    %371 = vector.broadcast %cst_139 : f32 to vector<16x1xf32>
    %372 = arith.divf %370, %371 : vector<16x1xf32>
    %373 = vector.broadcast %365 : vector<16x1xf32> to vector<16x32xf32>
    %374 = arith.subf %357, %373 : vector<16x32xf32>
    %cst_140 = arith.constant 9.99999974E-6 : f32
    %375 = vector.broadcast %cst_140 : f32 to vector<16x1xf32>
    %376 = arith.addf %372, %375 : vector<16x1xf32>
    %377 = math.rsqrt %376 : vector<16x1xf32>
    %378 = vector.broadcast %377 : vector<16x1xf32> to vector<16x32xf32>
    %379 = arith.mulf %374, %378 : vector<16x32xf32>
    %380 = vector.broadcast %359 : vector<1x32xf32> to vector<16x32xf32>
    %381 = arith.mulf %379, %380 : vector<16x32xf32>
    %382 = vector.broadcast %361 : vector<1x32xf32> to vector<16x32xf32>
    %383 = arith.addf %381, %382 : vector<16x32xf32>
    %384 = arith.truncf %383 : vector<16x32xf32> to vector<16x32xbf16>
    %cst_141 = arith.constant dense<0.000000e+00> : vector<16x64xf32>
    %385 = tpu.matmul %384, %227, %cst_141 {dimension_numbers = #tpu.dot_dimension_numbers<[1], [0], [0], [1], [0, 0, 1, 1], [], []>} : vector<16x32xbf16>, vector<32x64xbf16>, vector<16x64xf32> -> vector<16x64xf32>
    %386 = vector.broadcast %229 : vector<1x64xf32> to vector<16x64xf32>
    %387 = arith.addf %385, %386 : vector<16x64xf32>
    %cst_142 = arith.constant 0.000000e+00 : f32
    %388 = vector.broadcast %cst_142 : f32 to vector<16x64xf32>
    %389 = arith.maximumf %387, %388 : vector<16x64xf32>
    %390 = arith.truncf %389 : vector<16x64xf32> to vector<16x64xbf16>
    %cst_143 = arith.constant dense<0.000000e+00> : vector<16x32xf32>
    %391 = tpu.matmul %390, %231, %cst_143 {dimension_numbers = #tpu.dot_dimension_numbers<[1], [0], [0], [1], [0, 0, 1, 1], [], []>} : vector<16x64xbf16>, vector<64x32xbf16>, vector<16x32xf32> -> vector<16x32xf32>
    %392 = vector.broadcast %233 : vector<1x32xf32> to vector<16x32xf32>
    %393 = arith.addf %391, %392 : vector<16x32xf32>
    %394 = arith.addf %383, %393 : vector<16x32xf32>
    %c1_144 = arith.constant 1 : index
    %c0_145 = arith.constant 0 : index
    %c0_146 = arith.constant 0 : index
    %395 = vector.load %arg13[%c1_144, %c0_145, %c0_146] : memref<2x1x32xf32, #tpu.memory_space<vmem>>, vector<1x1x32xf32>
    %396 = vector.shape_cast %395 : vector<1x1x32xf32> to vector<1x32xf32>
    %c1_147 = arith.constant 1 : index
    %c0_148 = arith.constant 0 : index
    %c0_149 = arith.constant 0 : index
    %397 = vector.load %arg14[%c1_147, %c0_148, %c0_149] : memref<2x1x32xf32, #tpu.memory_space<vmem>>, vector<1x1x32xf32>
    %398 = vector.shape_cast %397 : vector<1x1x32xf32> to vector<1x32xf32>
    %cst_150 = arith.constant dense<0.000000e+00> : vector<16xf32>
    %399 = vector.multi_reduction <add>, %394, %cst_150 [1] : vector<16x32xf32> to vector<16xf32>
    %400 = vector.shape_cast %399 : vector<16xf32> to vector<16x1xf32>
    %cst_151 = arith.constant 3.200000e+01 : f32
    %401 = vector.broadcast %cst_151 : f32 to vector<16x1xf32>
    %402 = arith.divf %400, %401 : vector<16x1xf32>
    %403 = vector.broadcast %402 : vector<16x1xf32> to vector<16x32xf32>
    %404 = arith.subf %394, %403 : vector<16x32xf32>
    %405 = arith.mulf %404, %404 : vector<16x32xf32>
    %cst_152 = arith.constant dense<0.000000e+00> : vector<16xf32>
    %406 = vector.multi_reduction <add>, %405, %cst_152 [1] : vector<16x32xf32> to vector<16xf32>
    %407 = vector.shape_cast %406 : vector<16xf32> to vector<16x1xf32>
    %cst_153 = arith.constant 3.200000e+01 : f32
    %408 = vector.broadcast %cst_153 : f32 to vector<16x1xf32>
    %409 = arith.divf %407, %408 : vector<16x1xf32>
    %410 = vector.broadcast %402 : vector<16x1xf32> to vector<16x32xf32>
    %411 = arith.subf %394, %410 : vector<16x32xf32>
    %cst_154 = arith.constant 9.99999974E-6 : f32
    %412 = vector.broadcast %cst_154 : f32 to vector<16x1xf32>
    %413 = arith.addf %409, %412 : vector<16x1xf32>
    %414 = math.rsqrt %413 : vector<16x1xf32>
    %415 = vector.broadcast %414 : vector<16x1xf32> to vector<16x32xf32>
    %416 = arith.mulf %411, %415 : vector<16x32xf32>
    %417 = vector.broadcast %396 : vector<1x32xf32> to vector<16x32xf32>
    %418 = arith.mulf %416, %417 : vector<16x32xf32>
    %419 = vector.broadcast %398 : vector<1x32xf32> to vector<16x32xf32>
    %420 = arith.addf %418, %419 : vector<16x32xf32>
    %421 = vector.shape_cast %420 : vector<16x32xf32> to vector<2x8x32xf32>
    %c0_155 = arith.constant 0 : index
    %c0_156 = arith.constant 0 : index
    %c0_157 = arith.constant 0 : index
    %422 = vector.load %arg15[%c0_155, %c0_156, %c0_157] : memref<2x8x32xf32, #tpu.memory_space<vmem>>, vector<2x8x32xf32>
    tpu.vector_store %arg15[%c0_155, %c0_156, %c0_157], %421 {strides = array<i32>} : memref<2x8x32xf32, #tpu.memory_space<vmem>>, vector<2x8x32xf32>,
    return
  }
}

</mosaic_0001>

<llo_original>
// kernel: encoder_forward.1
$region0: #{encoder_forward.1}
  #allocation0 [shape = 'u32[]', space=smem, size = 0x4, offset = 0x4, fixed_abs, tag = 'smem constant byte address 0x4 - core index']
  #allocation1 [shape = 'u32[72,128]{1,0:T(1,128)}', space=vmem, size = 0x9000, scoped, tag = 'internal scratch']
  %s0 = inlined_call_operand.vmem [shape: f32[16,32], index: 0, kind: input, shape index: {}]
  %s1 = inlined_call_operand.vmem [shape: f32[8,32], index: 1, kind: input, shape index: {}]
  %s2 = inlined_call_operand.vmem [shape: f32[2,8], index: 2, kind: input, shape index: {}]
  %s3 = inlined_call_operand.vmem [shape: bf16[2,32,96], index: 3, kind: input, shape index: {}]
  %s4 = inlined_call_operand.vmem [shape: f32[2,1,96], index: 4, kind: input, shape index: {}]
  %s5 = inlined_call_operand.vmem [shape: bf16[2,32,32], index: 5, kind: input, shape index: {}]
  %s6 = inlined_call_operand.vmem [shape: f32[2,1,32], index: 6, kind: input, shape index: {}]
  %s7 = inlined_call_operand.vmem [shape: f32[2,1,32], index: 7, kind: input, shape index: {}]
  %s8 = inlined_call_operand.vmem [shape: f32[2,1,32], index: 8, kind: input, shape index: {}]
  %s9 = inlined_call_operand.vmem [shape: bf16[2,32,64], index: 9, kind: input, shape index: {}]
  %s10 = inlined_call_operand.vmem [shape: f32[2,1,64], index: 10, kind: input, shape index: {}]
  %s11 = inlined_call_operand.vmem [shape: bf16[2,64,32], index: 11, kind: input, shape index: {}]
  %s12 = inlined_call_operand.vmem [shape: f32[2,1,32], index: 12, kind: input, shape index: {}]
  %s13 = inlined_call_operand.vmem [shape: f32[2,1,32], index: 13, kind: input, shape index: {}]
  %s14 = inlined_call_operand.vmem [shape: f32[2,1,32], index: 14, kind: input, shape index: {}]
  %s15 = inlined_call_operand.hbm [shape: f32[2,8,32], index: 15, kind: output, shape index: {}]
  %s16 = sld [smem:[#allocation0]]
  $region70: #{encoder_forward.1} parent=0
    _
  %s18 = ssub.s32 1, %s16
  %s19 = scalar_select 0, %s18, %s16
  $region1: #{encoder_forward.1} parent=0
    #allocation2 [shape = 'u8[8192]{0}', space=vmem, size = 0x2000, scoped, tag = 'output window, operand 0, single buffered']
    #allocation3 [shape = 's32[1]{0}', space=sflag, size = 0x4, scoped, tag = 'scoped memory for encoder_forward.1']
    %20 = vsyncpa [#allocation3], 0
    // Predicated region
    $region2: #{encoder_forward.1} parent=1 // pred_check
      _
    $region3: #{encoder_forward.1} parent=1 // pred_check_branch
      %22 = sbr.rel (0) target = $region5
    $region4: #{encoder_forward.1} parent=1 // pred_region
      _
    $region5: #{encoder_forward.1} parent=1 // pred_fallthru
      _
    // Predicated region
    $region6: #{encoder_forward.1} parent=1 // pred_check
      _
    $region7: #{encoder_forward.1} parent=1 // pred_check_branch
      %24 = sbr.rel (0) target = $region9
    $region8: #{encoder_forward.1} parent=1 // pred_region
      _
    $region9: #{encoder_forward.1} parent=1 // pred_fallthru
      _
    // Predicated region
    $region10: #{encoder_forward.1} parent=1 // pred_check
      _
    $region11: #{encoder_forward.1} parent=1 // pred_check_branch
      %26 = sbr.rel (0) target = $region13
    $region12: #{encoder_forward.1} parent=1 // pred_region
      _
    $region13: #{encoder_forward.1} parent=1 // pred_fallthru
      _
    // Predicated region
    $region14: #{encoder_forward.1} parent=1 // pred_check
      _
    $region15: #{encoder_forward.1} parent=1 // pred_check_branch
      %28 = sbr.rel (0) target = $region17
    $region16: #{encoder_forward.1} parent=1 // pred_region
      _
    $region17: #{encoder_forward.1} parent=1 // pred_fallthru
      _
    // Predicated region
    $region18: #{encoder_forward.1} parent=1 // pred_check
      _
    $region19: #{encoder_forward.1} parent=1 // pred_check_branch
      %30 = sbr.rel (0) target = $region21
    $region20: #{encoder_forward.1} parent=1 // pred_region
      _
    $region21: #{encoder_forward.1} parent=1 // pred_fallthru
      _
    // Predicated region
    $region22: #{encoder_forward.1} parent=1 // pred_check
      _
    $region23: #{encoder_forward.1} parent=1 // pred_check_branch
      %32 = sbr.rel (0) target = $region25
    $region24: #{encoder_forward.1} parent=1 // pred_region
      _
    $region25: #{encoder_forward.1} parent=1 // pred_fallthru
      _
    // Predicated region
    $region26: #{encoder_forward.1} parent=1 // pred_check
      _
    $region27: #{encoder_forward.1} parent=1 // pred_check_branch
      %34 = sbr.rel (0) target = $region29
    $region28: #{encoder_forward.1} parent=1 // pred_region
      _
    $region29: #{encoder_forward.1} parent=1 // pred_fallthru
      _
    // Predicated region
    $region30: #{encoder_forward.1} parent=1 // pred_check
      _
    $region31: #{encoder_forward.1} parent=1 // pred_check_branch
      %36 = sbr.rel (0) target = $region33
    $region32: #{encoder_forward.1} parent=1 // pred_region
      _
    $region33: #{encoder_forward.1} parent=1 // pred_fallthru
      _
    // Predicated region
    $region34: #{encoder_forward.1} parent=1 // pred_check
      _
    $region35: #{encoder_forward.1} parent=1 // pred_check_branch
      %38 = sbr.rel (0) target = $region37
    $region36: #{encoder_forward.1} parent=1 // pred_region
      _
    $region37: #{encoder_forward.1} parent=1 // pred_fallthru
      _
    // Predicated region
    $region38: #{encoder_forward.1} parent=1 // pred_check
      _
    $region39: #{encoder_forward.1} parent=1 // pred_check_branch
      %40 = sbr.rel (0) target = $region41
    $region40: #{encoder_forward.1} parent=1 // pred_region
      _
    $region41: #{encoder_forward.1} parent=1 // pred_fallthru
      _
    // Predicated region
    $region42: #{encoder_forward.1} parent=1 // pred_check
      _
    $region43: #{encoder_forward.1} parent=1 // pred_check_branch
      %42 = sbr.rel (0) target = $region45
    $region44: #{encoder_forward.1} parent=1 // pred_region
      _
    $region45: #{encoder_forward.1} parent=1 // pred_fallthru
      _
    // Predicated region
    $region46: #{encoder_forward.1} parent=1 // pred_check
      _
    $region47: #{encoder_forward.1} parent=1 // pred_check_branch
      %44 = sbr.rel (0) target = $region49
    $region48: #{encoder_forward.1} parent=1 // pred_region
      _
    $region49: #{encoder_forward.1} parent=1 // pred_fallthru
      _
    // Predicated region
    $region50: #{encoder_forward.1} parent=1 // pred_check
      _
    $region51: #{encoder_forward.1} parent=1 // pred_check_branch
      %46 = sbr.rel (0) target = $region53
    $region52: #{encoder_forward.1} parent=1 // pred_region
      _
    $region53: #{encoder_forward.1} parent=1 // pred_fallthru
      _
    // Predicated region
    $region54: #{encoder_forward.1} parent=1 // pred_check
      _
    $region55: #{encoder_forward.1} parent=1 // pred_check_branch
      %48 = sbr.rel (0) target = $region57
    $region56: #{encoder_forward.1} parent=1 // pred_region
      _
    $region57: #{encoder_forward.1} parent=1 // pred_fallthru
      _
    // Predicated region
    $region58: #{encoder_forward.1} parent=1 // pred_check
      _
    $region59: #{encoder_forward.1} parent=1 // pred_check_branch
      %50 = sbr.rel (0) target = $region61
    $region60: #{encoder_forward.1} parent=1 // pred_region
      _
    $region61: #{encoder_forward.1} parent=1 // pred_fallthru
      _
    %v52 = vld [vmem:[%s0] sm:$0xff]
    %v53 = vld [vmem:[%s0 + $0x8] sm:$0xff]
    %v54 = vmul.f32 %v52, 5.656854
    %v55 = vmul.f32 %v53, 5.656854
    %v56 = vld [vmem:[%s1] sm:$0xff]
    %v57 = vadd.f32 %v54, %v56
    %v58 = vadd.f32 %v55, %v56
    %v59 = vld [vmem:[%s2] sm:$0x3]
    %vm60 = vcmp.lt.f32.partialorder %v59, 0.5
    %v61 = vsel %vm60, -1e+10, 0.0
    %v62 = vld [vmem:[%s3] sm:$0xf]
    %v63 = vld [vmem:[%s3 + $0x4] sm:$0xf]
    %v64 = vld [vmem:[%s3 + $0x8] sm:$0xf]
    %v65 = vld [vmem:[%s3 + $0xc] sm:$0xf]
    %v66 = vld [vmem:[%s4] sm:$0x1]
    %v67 = vld [vmem:[%s5] sm:$0xf]
    %v68 = vld [vmem:[%s5 + $0x4] sm:$0xf]
    %v69 = vld [vmem:[%s5 + $0x8] sm:$0xf]
    %v70 = vld [vmem:[%s5 + $0xc] sm:$0xf]
    %v71 = vld [vmem:[%s6] sm:$0x1]
    %v72 = vld [vmem:[%s9] sm:$0xf]
    %v73 = vld [vmem:[%s9 + $0x4] sm:$0xf]
    %v74 = vld [vmem:[%s9 + $0x8] sm:$0xf]
    %v75 = vld [vmem:[%s9 + $0xc] sm:$0xf]
    %v76 = vld [vmem:[%s10] sm:$0x1]
    %v77 = vld [vmem:[%s11] sm:$0xf]
    %v78 = vld [vmem:[%s11 + $0x4] sm:$0xf]
    %v79 = vld [vmem:[%s11 + $0x8] sm:$0xf]
    %v80 = vld [vmem:[%s11 + $0xc] sm:$0xf]
    %v81 = vld [vmem:[%s11 + $0x10] sm:$0xf]
    %v82 = vld [vmem:[%s11 + $0x14] sm:$0xf]
    %v83 = vld [vmem:[%s11 + $0x18] sm:$0xf]
    %v84 = vld [vmem:[%s11 + $0x1c] sm:$0xf]
    %v85 = vld [vmem:[%s12] sm:$0x1]
    %v86 = vpack.c.bf16 %v58, %v57
    %v88 = vperm.slane %v66, 0
    %v94 = vunpack.c.l.b16 %v62
    %v95 = vunpack.c.l.b16 %v63
    %v96 = vunpack.c.l.b16 %v64
    %v97 = vunpack.c.l.b16 %v65
    %v98 = vpack.c.b16 %v95, %v94
    %v99 = vpack.c.b16 %v97, %v96
    %vm102 = vcmask 261120
    %v104 = vsel %vm102, %v86, 0
    %106 = vmatpush.bf16.msra.mxu0 0
    %107 = vmatpush.bf16.msra.mxu0 0
    %108 = vmatpush.bf16.msra.mxu0 0
    %109 = vmatpush.bf16.msra.mxu0 0
    %110 = vmatpush.bf16.msra.mxu0 0
    %111 = vmatpush.bf16.msra.mxu0 0
    %112 = vmatpush.bf16.msra.mxu0 %v99
    %113 = vmatpush.bf16.msra.mxu0 %v98
    %114 = vmatmul.bf16.gmra.mxu0 %v104
    %v115 = vpop.f32.mrf.mxu0
    %v116 = vadd.f32 %v88, %v115
    %v117 = vpop.f32.mrf.mxu0
    %v118 = vadd.f32 %v88, %v117
    %119 = vdwg.mxu0
    %v121 = vperm.slane %v71, 0
    %v123 = vpack.c.bf16 %v116, %v116
    %v124 = vpack.c.bf16 %v118, %v118
    %v126 = vunpack.c.l.b16 %v123
    %v127 = vpack.c.b16 %v126, %v126
    %128 = vrot.lane.b32.xlu0 %v127, 96
    %v129 = vpop.permute.xlu0 %128
    %vm130 = vcmask 64512
    %v132 = vsel %vm130, %v123, 0
    %v135 = vsel %vm130, %v129, 0
    %137 = vmatpush.bf16.xpose.msra.mxu0 0
    %138 = vmatpush.bf16.xpose.msra.mxu0 0
    %139 = vmatpush.bf16.xpose.msra.mxu0 0
    %140 = vmatpush.bf16.xpose.msra.mxu0 0
    %141 = vmatpush.bf16.xpose.msra.mxu0 0
    %142 = vmatpush.bf16.xpose.msra.mxu0 0
    %143 = vmatpush.bf16.xpose.msra.mxu0 0
    %144 = vmatpush.bf16.xpose.msra.mxu0 %v135
    %145 = vmatmul.bf16.gmra.mxu0 %v132
    %v146 = vpop.f32.mrf.mxu0
    %v147 = vadd.f32 0.0, %v146
    %v148 = vpop.f32.mrf.mxu0
    %149 = vdwg.mxu0
    %v151 = vunpack.c.l.b16 %v124
    %v152 = vpack.c.b16 %v151, %v151
    %153 = vrot.lane.b32.xlu0 %v152, 96
    %v154 = vpop.permute.xlu0 %153
    %v156 = vsel %vm130, %v124, 0
    %v159 = vsel %vm130, %v154, 0
    %161 = vmatpush.bf16.xpose.msra.mxu0 0
    %162 = vmatpush.bf16.xpose.msra.mxu0 0
    %163 = vmatpush.bf16.xpose.msra.mxu0 0
    %164 = vmatpush.bf16.xpose.msra.mxu0 0
    %165 = vmatpush.bf16.xpose.msra.mxu0 0
    %166 = vmatpush.bf16.xpose.msra.mxu0 0
    %167 = vmatpush.bf16.xpose.msra.mxu0 0
    %168 = vmatpush.bf16.xpose.msra.mxu0 %v159
    %169 = vmatmul.bf16.gmra.mxu0 %v156
    %v170 = vpop.f32.mrf.mxu0
    %v171 = vadd.f32 0.0, %v170
    %v172 = vpop.f32.mrf.mxu0
    %173 = vdwg.mxu0
    %v174 = vmul.f32 %v147, 0.35355338
    %v175 = vmul.f32 %v171, 0.35355338
    %v177 = vrot.slane %v61, 1
    %v178 = vperm.slane %v61, 0
    %v179 = vperm.slane %v177, 0
    %v182 = vadd.f32 %v174, %v178
    %v183 = vadd.f32 %v175, %v179
    %v184 = vsel %vm130, %v182, -inf
    %185 = vmax.xlane.f32.xlu0 %v184
    %v186 = vpop.xlane.xlu0 %185
    %v187 = vsel %vm130, %v183, -inf
    %188 = vmax.xlane.f32.xlu0 %v187
    %v189 = vpop.xlane.xlu0 %188
    %v190 = vsub.f32 %v182, %v186
    %v191 = vsub.f32 %v183, %v189
    %v192 = vmul.f32 %v190, 1.442695
    %v193 = vpow.pop %v192
    %v194 = vmul.f32 %v191, 1.442695
    %v195 = vpow.pop %v194
    %v196 = vsel %vm130, %v193, 0.0
    %197 = vadd.xlane.f32.xlu0 %v196
    %v198 = vpop.xlane.xlu0 %197
    %v199 = vsel %vm130, %v195, 0.0
    %200 = vadd.xlane.f32.xlu0 %v199
    %v201 = vpop.xlane.xlu0 %200
    %v202 = vrcp.pop %v198
    %v203 = vrcp.pop %v201
    %v204 = vmul.f32 %v193, %v202
    %v205 = vmul.f32 %v195, %v203
    %v206 = vpack.c.bf16 %v204, %v204
    %v207 = vpack.c.bf16 %v205, %v205
    %208 = vrot.lane.b32.xlu0 %v127, 64
    %v209 = vpop.permute.xlu0 %208
    %v211 = vsel %vm130, %v206, 0
    %vm213 = vcmask 1043456
    %v215 = vsel %vm213, %v209, 0
    %217 = vmatpush.bf16.msra.mxu0 0
    %218 = vmatpush.bf16.msra.mxu0 0
    %219 = vmatpush.bf16.msra.mxu0 0
    %220 = vmatpush.bf16.msra.mxu0 0
    %221 = vmatpush.bf16.msra.mxu0 0
    %222 = vmatpush.bf16.msra.mxu0 0
    %223 = vmatpush.bf16.msra.mxu0 0
    %224 = vmatpush.bf16.msra.mxu0 %v215
    %225 = vmatmul.bf16.gmra.mxu0 %v211
    %v226 = vpop.f32.mrf.mxu0
    %v227 = vadd.f32 0.0, %v226
    %v228 = vpop.f32.mrf.mxu0
    %229 = vdwg.mxu0
    %230 = vrot.lane.b32.xlu0 %v152, 64
    %v231 = vpop.permute.xlu0 %230
    %v233 = vsel %vm130, %v207, 0
    %v236 = vsel %vm213, %v231, 0
    %238 = vmatpush.bf16.msra.mxu0 0
    %239 = vmatpush.bf16.msra.mxu0 0
    %240 = vmatpush.bf16.msra.mxu0 0
    %241 = vmatpush.bf16.msra.mxu0 0
    %242 = vmatpush.bf16.msra.mxu0 0
    %243 = vmatpush.bf16.msra.mxu0 0
    %244 = vmatpush.bf16.msra.mxu0 0
    %245 = vmatpush.bf16.msra.mxu0 %v236
    %246 = vmatmul.bf16.gmra.mxu0 %v233
    %v247 = vpop.f32.mrf.mxu0
    %v248 = vadd.f32 0.0, %v247
    %v249 = vpop.f32.mrf.mxu0
    %250 = vdwg.mxu0
    %v251 = vpack.c.bf16 %v248, %v227
    %v253 = vsel %vm130, %v251, 0
    %v256 = vsel %vm213, %v67, 0
    %258 = vmatpush.bf16.msra.mxu0 0
    %259 = vmatpush.bf16.msra.mxu0 0
    %260 = vmatpush.bf16.msra.mxu0 0
    %261 = vmatpush.bf16.msra.mxu0 0
    %262 = vmatpush.bf16.msra.mxu0 0
    %263 = vmatpush.bf16.msra.mxu0 0
    %264 = vmatpush.bf16.msra.mxu0 0
    %265 = vmatpush.bf16.msra.mxu0 %v256
    %266 = vmatmul.bf16.gmra.mxu0 %v253
    %v267 = vpop.f32.mrf.mxu0
    %v268 = vadd.f32 0.0, %v267
    %v269 = vpop.f32.mrf.mxu0
    %v270 = vadd.f32 0.0, %v269
    %271 = vdwg.mxu0
    %v272 = vadd.f32 %v121, %v268
    %v273 = vadd.f32 %v121, %v270
    %274 = vrot.lane.b32.xlu0 %v127, 120
    %v275 = vpop.permute.xlu0 %274
    %276 = vrot.lane.b32.xlu0 %v127, 88
    %v277 = vpop.permute.xlu0 %276
    %v279 = vsel %vm130, %v275, 0
    %v282 = vsel %vm130, %v277, 0
    %284 = vmatpush.bf16.xpose.msra.mxu0 0
    %285 = vmatpush.bf16.xpose.msra.mxu0 0
    %286 = vmatpush.bf16.xpose.msra.mxu0 0
    %287 = vmatpush.bf16.xpose.msra.mxu0 0
    %288 = vmatpush.bf16.xpose.msra.mxu0 0
    %289 = vmatpush.bf16.xpose.msra.mxu0 0
    %290 = vmatpush.bf16.xpose.msra.mxu0 0
    %291 = vmatpush.bf16.xpose.msra.mxu0 %v282
    %292 = vmatmul.bf16.gmra.mxu0 %v279
    %v293 = vpop.f32.mrf.mxu0
    %v294 = vadd.f32 0.0, %v293
    %v295 = vpop.f32.mrf.mxu0
    %296 = vdwg.mxu0
    %297 = vrot.lane.b32.xlu0 %v152, 120
    %v298 = vpop.permute.xlu0 %297
    %299 = vrot.lane.b32.xlu0 %v152, 88
    %v300 = vpop.permute.xlu0 %299
    %v302 = vsel %vm130, %v298, 0
    %v305 = vsel %vm130, %v300, 0
    %307 = vmatpush.bf16.xpose.msra.mxu0 0
    %308 = vmatpush.bf16.xpose.msra.mxu0 0
    %309 = vmatpush.bf16.xpose.msra.mxu0 0
    %310 = vmatpush.bf16.xpose.msra.mxu0 0
    %311 = vmatpush.bf16.xpose.msra.mxu0 0
    %312 = vmatpush.bf16.xpose.msra.mxu0 0
    %313 = vmatpush.bf16.xpose.msra.mxu0 0
    %314 = vmatpush.bf16.xpose.msra.mxu0 %v305
    %315 = vmatmul.bf16.gmra.mxu0 %v302
    %v316 = vpop.f32.mrf.mxu0
    %v317 = vadd.f32 0.0, %v316
    %v318 = vpop.f32.mrf.mxu0
    %319 = vdwg.mxu0
    %v320 = vmul.f32 %v294, 0.35355338
    %v321 = vmul.f32 %v317, 0.35355338
    %v322 = vadd.f32 %v320, %v178
    %v323 = vadd.f32 %v321, %v179
    %v324 = vsel %vm130, %v322, -inf
    %325 = vmax.xlane.f32.xlu0 %v324
    %v326 = vpop.xlane.xlu0 %325
    %v327 = vsel %vm130, %v323, -inf
    %328 = vmax.xlane.f32.xlu0 %v327
    %v329 = vpop.xlane.xlu0 %328
    %v330 = vsub.f32 %v322, %v326
    %v331 = vsub.f32 %v323, %v329
    %v332 = vmul.f32 %v330, 1.442695
    %v333 = vpow.pop %v332
    %v334 = vmul.f32 %v331, 1.442695
    %v335 = vpow.pop %v334
    %v336 = vsel %vm130, %v333, 0.0
    %337 = vadd.xlane.f32.xlu0 %v336
    %v338 = vpop.xlane.xlu0 %337
    %v339 = vsel %vm130, %v335, 0.0
    %340 = vadd.xlane.f32.xlu0 %v339
    %v341 = vpop.xlane.xlu0 %340
    %v342 = vrcp.pop %v338
    %v343 = vrcp.pop %v341
    %v344 = vmul.f32 %v333, %v342
    %v345 = vmul.f32 %v335, %v343
    %v346 = vpack.c.bf16 %v344, %v344
    %v347 = vpack.c.bf16 %v345, %v345
    %348 = vrot.lane.b32.xlu0 %v127, 56
    %v349 = vpop.permute.xlu0 %348
    %v351 = vsel %vm130, %v346, 0
    %v354 = vsel %vm213, %v349, 0
    %356 = vmatpush.bf16.msra.mxu0 0
    %357 = vmatpush.bf16.msra.mxu0 0
    %358 = vmatpush.bf16.msra.mxu0 0
    %359 = vmatpush.bf16.msra.mxu0 0
    %360 = vmatpush.bf16.msra.mxu0 0
    %361 = vmatpush.bf16.msra.mxu0 0
    %362 = vmatpush.bf16.msra.mxu0 0
    %363 = vmatpush.bf16.msra.mxu0 %v354
    %364 = vmatmul.bf16.gmra.mxu0 %v351
    %v365 = vpop.f32.mrf.mxu0
    %v366 = vadd.f32 0.0, %v365
    %v367 = vpop.f32.mrf.mxu0
    %368 = vdwg.mxu0
    %369 = vrot.lane.b32.xlu0 %v152, 56
    %v370 = vpop.permute.xlu0 %369
    %v372 = vsel %vm130, %v347, 0
    %v375 = vsel %vm213, %v370, 0
    %377 = vmatpush.bf16.msra.mxu0 0
    %378 = vmatpush.bf16.msra.mxu0 0
    %379 = vmatpush.bf16.msra.mxu0 0
    %380 = vmatpush.bf16.msra.mxu0 0
    %381 = vmatpush.bf16.msra.mxu0 0
    %382 = vmatpush.bf16.msra.mxu0 0
    %383 = vmatpush.bf16.msra.mxu0 0
    %384 = vmatpush.bf16.msra.mxu0 %v375
    %385 = vmatmul.bf16.gmra.mxu0 %v372
    %v386 = vpop.f32.mrf.mxu0
    %v387 = vadd.f32 0.0, %v386
    %v388 = vpop.f32.mrf.mxu0
    %389 = vdwg.mxu0
    %v390 = vpack.c.bf16 %v387, %v366
    %v392 = vsel %vm130, %v390, 0
    %v395 = vsel %vm213, %v68, 0
    %397 = vmatpush.bf16.msra.mxu0 0
    %398 = vmatpush.bf16.msra.mxu0 0
    %399 = vmatpush.bf16.msra.mxu0 0
    %400 = vmatpush.bf16.msra.mxu0 0
    %401 = vmatpush.bf16.msra.mxu0 0
    %402 = vmatpush.bf16.msra.mxu0 0
    %403 = vmatpush.bf16.msra.mxu0 0
    %404 = vmatpush.bf16.msra.mxu0 %v395
    %405 = vmatmul.bf16.gmra.mxu0 %v392
    %v406 = vpop.f32.mrf.mxu0
    %v407 = vadd.f32 0.0, %v406
    %v408 = vpop.f32.mrf.mxu0
    %v409 = vadd.f32 0.0, %v408
    %410 = vdwg.mxu0
    %v411 = vadd.f32 %v272, %v407
    %v412 = vadd.f32 %v273, %v409
    %413 = vrot.lane.b32.xlu0 %v127, 112
    %v414 = vpop.permute.xlu0 %413
    %415 = vrot.lane.b32.xlu0 %v127, 80
    %v416 = vpop.permute.xlu0 %415
    %v418 = vsel %vm130, %v414, 0
    %v421 = vsel %vm130, %v416, 0
    %423 = vmatpush.bf16.xpose.msra.mxu0 0
    %424 = vmatpush.bf16.xpose.msra.mxu0 0
    %425 = vmatpush.bf16.xpose.msra.mxu0 0
    %426 = vmatpush.bf16.xpose.msra.mxu0 0
    %427 = vmatpush.bf16.xpose.msra.mxu0 0
    %428 = vmatpush.bf16.xpose.msra.mxu0 0
    %429 = vmatpush.bf16.xpose.msra.mxu0 0
    %430 = vmatpush.bf16.xpose.msra.mxu0 %v421
    %431 = vmatmul.bf16.gmra.mxu0 %v418
    %v432 = vpop.f32.mrf.mxu0
    %v433 = vadd.f32 0.0, %v432
    %v434 = vpop.f32.mrf.mxu0
    %435 = vdwg.mxu0
    %436 = vrot.lane.b32.xlu0 %v152, 112
    %v437 = vpop.permute.xlu0 %436
    %438 = vrot.lane.b32.xlu0 %v152, 80
    %v439 = vpop.permute.xlu0 %438
    %v441 = vsel %vm130, %v437, 0
    %v444 = vsel %vm130, %v439, 0
    %446 = vmatpush.bf16.xpose.msra.mxu0 0
    %447 = vmatpush.bf16.xpose.msra.mxu0 0
    %448 = vmatpush.bf16.xpose.msra.mxu0 0
    %449 = vmatpush.bf16.xpose.msra.mxu0 0
    %450 = vmatpush.bf16.xpose.msra.mxu0 0
    %451 = vmatpush.bf16.xpose.msra.mxu0 0
    %452 = vmatpush.bf16.xpose.msra.mxu0 0
    %453 = vmatpush.bf16.xpose.msra.mxu0 %v444
    %454 = vmatmul.bf16.gmra.mxu0 %v441
    %v455 = vpop.f32.mrf.mxu0
    %v456 = vadd.f32 0.0, %v455
    %v457 = vpop.f32.mrf.mxu0
    %458 = vdwg.mxu0
    %v459 = vmul.f32 %v433, 0.35355338
    %v460 = vmul.f32 %v456, 0.35355338
    %v461 = vadd.f32 %v459, %v178
    %v462 = vadd.f32 %v460, %v179
    %v463 = vsel %vm130, %v461, -inf
    %464 = vmax.xlane.f32.xlu0 %v463
    %v465 = vpop.xlane.xlu0 %464
    %v466 = vsel %vm130, %v462, -inf
    %467 = vmax.xlane.f32.xlu0 %v466
    %v468 = vpop.xlane.xlu0 %467
    %v469 = vsub.f32 %v461, %v465
    %v470 = vsub.f32 %v462, %v468
    %v471 = vmul.f32 %v469, 1.442695
    %v472 = vpow.pop %v471
    %v473 = vmul.f32 %v470, 1.442695
    %v474 = vpow.pop %v473
    %v475 = vsel %vm130, %v472, 0.0
    %476 = vadd.xlane.f32.xlu0 %v475
    %v477 = vpop.xlane.xlu0 %476
    %v478 = vsel %vm130, %v474, 0.0
    %479 = vadd.xlane.f32.xlu0 %v478
    %v480 = vpop.xlane.xlu0 %479
    %v481 = vrcp.pop %v477
    %v482 = vrcp.pop %v480
    %v483 = vmul.f32 %v472, %v481
    %v484 = vmul.f32 %v474, %v482
    %v485 = vpack.c.bf16 %v483, %v483
    %v486 = vpack.c.bf16 %v484, %v484
    %487 = vrot.lane.b32.xlu0 %v127, 48
    %v488 = vpop.permute.xlu0 %487
    %v490 = vsel %vm130, %v485, 0
    %v493 = vsel %vm213, %v488, 0
    %495 = vmatpush.bf16.msra.mxu0 0
    %496 = vmatpush.bf16.msra.mxu0 0
    %497 = vmatpush.bf16.msra.mxu0 0
    %498 = vmatpush.bf16.msra.mxu0 0
    %499 = vmatpush.bf16.msra.mxu0 0
    %500 = vmatpush.bf16.msra.mxu0 0
    %501 = vmatpush.bf16.msra.mxu0 0
    %502 = vmatpush.bf16.msra.mxu0 %v493
    %503 = vmatmul.bf16.gmra.mxu0 %v490
    %v504 = vpop.f32.mrf.mxu0
    %v505 = vadd.f32 0.0, %v504
    %v506 = vpop.f32.mrf.mxu0
    %507 = vdwg.mxu0
    %508 = vrot.lane.b32.xlu0 %v152, 48
    %v509 = vpop.permute.xlu0 %508
    %v511 = vsel %vm130, %v486, 0
    %v514 = vsel %vm213, %v509, 0
    %516 = vmatpush.bf16.msra.mxu0 0
    %517 = vmatpush.bf16.msra.mxu0 0
    %518 = vmatpush.bf16.msra.mxu0 0
    %519 = vmatpush.bf16.msra.mxu0 0
    %520 = vmatpush.bf16.msra.mxu0 0
    %521 = vmatpush.bf16.msra.mxu0 0
    %522 = vmatpush.bf16.msra.mxu0 0
    %523 = vmatpush.bf16.msra.mxu0 %v514
    %524 = vmatmul.bf16.gmra.mxu0 %v511
    %v525 = vpop.f32.mrf.mxu0
    %v526 = vadd.f32 0.0, %v525
    %v527 = vpop.f32.mrf.mxu0
    %528 = vdwg.mxu0
    %v529 = vpack.c.bf16 %v526, %v505
    %v531 = vsel %vm130, %v529, 0
    %v534 = vsel %vm213, %v69, 0
    %536 = vmatpush.bf16.msra.mxu0 0
    %537 = vmatpush.bf16.msra.mxu0 0
    %538 = vmatpush.bf16.msra.mxu0 0
    %539 = vmatpush.bf16.msra.mxu0 0
    %540 = vmatpush.bf16.msra.mxu0 0
    %541 = vmatpush.bf16.msra.mxu0 0
    %542 = vmatpush.bf16.msra.mxu0 0
    %543 = vmatpush.bf16.msra.mxu0 %v534
    %544 = vmatmul.bf16.gmra.mxu0 %v531
    %v545 = vpop.f32.mrf.mxu0
    %v546 = vadd.f32 0.0, %v545
    %v547 = vpop.f32.mrf.mxu0
    %v548 = vadd.f32 0.0, %v547
    %549 = vdwg.mxu0
    %v550 = vadd.f32 %v411, %v546
    %v551 = vadd.f32 %v412, %v548
    %552 = vrot.lane.b32.xlu0 %v127, 104
    %v553 = vpop.permute.xlu0 %552
    %554 = vrot.lane.b32.xlu0 %v127, 72
    %v555 = vpop.permute.xlu0 %554
    %v557 = vsel %vm130, %v553, 0
    %v560 = vsel %vm130, %v555, 0
    %562 = vmatpush.bf16.xpose.msra.mxu0 0
    %563 = vmatpush.bf16.xpose.msra.mxu0 0
    %564 = vmatpush.bf16.xpose.msra.mxu0 0
    %565 = vmatpush.bf16.xpose.msra.mxu0 0
    %566 = vmatpush.bf16.xpose.msra.mxu0 0
    %567 = vmatpush.bf16.xpose.msra.mxu0 0
    %568 = vmatpush.bf16.xpose.msra.mxu0 0
    %569 = vmatpush.bf16.xpose.msra.mxu0 %v560
    %570 = vmatmul.bf16.gmra.mxu0 %v557
    %v571 = vpop.f32.mrf.mxu0
    %v572 = vadd.f32 0.0, %v571
    %v573 = vpop.f32.mrf.mxu0
    %574 = vdwg.mxu0
    %575 = vrot.lane.b32.xlu0 %v152, 104
    %v576 = vpop.permute.xlu0 %575
    %577 = vrot.lane.b32.xlu0 %v152, 72
    %v578 = vpop.permute.xlu0 %577
    %v580 = vsel %vm130, %v576, 0
    %v583 = vsel %vm130, %v578, 0
    %585 = vmatpush.bf16.xpose.msra.mxu0 0
    %586 = vmatpush.bf16.xpose.msra.mxu0 0
    %587 = vmatpush.bf16.xpose.msra.mxu0 0
    %588 = vmatpush.bf16.xpose.msra.mxu0 0
    %589 = vmatpush.bf16.xpose.msra.mxu0 0
    %590 = vmatpush.bf16.xpose.msra.mxu0 0
    %591 = vmatpush.bf16.xpose.msra.mxu0 0
    %592 = vmatpush.bf16.xpose.msra.mxu0 %v583
    %593 = vmatmul.bf16.gmra.mxu0 %v580
    %v594 = vpop.f32.mrf.mxu0
    %v595 = vadd.f32 0.0, %v594
    %v596 = vpop.f32.mrf.mxu0
    %597 = vdwg.mxu0
    %v598 = vmul.f32 %v572, 0.35355338
    %v599 = vmul.f32 %v595, 0.35355338
    %v600 = vadd.f32 %v598, %v178
    %v601 = vadd.f32 %v599, %v179
    %v602 = vsel %vm130, %v600, -inf
    %603 = vmax.xlane.f32.xlu0 %v602
    %v604 = vpop.xlane.xlu0 %603
    %v605 = vsel %vm130, %v601, -inf
    %606 = vmax.xlane.f32.xlu0 %v605
    %v607 = vpop.xlane.xlu0 %606
    %v608 = vsub.f32 %v600, %v604
    %v609 = vsub.f32 %v601, %v607
    %v610 = vmul.f32 %v608, 1.442695
    %v611 = vpow.pop %v610
    %v612 = vmul.f32 %v609, 1.442695
    %v613 = vpow.pop %v612
    %v614 = vsel %vm130, %v611, 0.0
    %615 = vadd.xlane.f32.xlu0 %v614
    %v616 = vpop.xlane.xlu0 %615
    %v617 = vsel %vm130, %v613, 0.0
    %618 = vadd.xlane.f32.xlu0 %v617
    %v619 = vpop.xlane.xlu0 %618
    %v620 = vrcp.pop %v616
    %v621 = vrcp.pop %v619
    %v622 = vmul.f32 %v611, %v620
    %v623 = vmul.f32 %v613, %v621
    %v624 = vpack.c.bf16 %v622, %v622
    %v625 = vpack.c.bf16 %v623, %v623
    %626 = vrot.lane.b32.xlu0 %v127, 40
    %v627 = vpop.permute.xlu0 %626
    %v629 = vsel %vm130, %v624, 0
    %v632 = vsel %vm213, %v627, 0
    %634 = vmatpush.bf16.msra.mxu0 0
    %635 = vmatpush.bf16.msra.mxu0 0
    %636 = vmatpush.bf16.msra.mxu0 0
    %637 = vmatpush.bf16.msra.mxu0 0
    %638 = vmatpush.bf16.msra.mxu0 0
    %639 = vmatpush.bf16.msra.mxu0 0
    %640 = vmatpush.bf16.msra.mxu0 0
    %641 = vmatpush.bf16.msra.mxu0 %v632
    %642 = vmatmul.bf16.gmra.mxu0 %v629
    %v643 = vpop.f32.mrf.mxu0
    %v644 = vadd.f32 0.0, %v643
    %v645 = vpop.f32.mrf.mxu0
    %646 = vdwg.mxu0
    %647 = vrot.lane.b32.xlu0 %v152, 40
    %v648 = vpop.permute.xlu0 %647
    %v650 = vsel %vm130, %v625, 0
    %v653 = vsel %vm213, %v648, 0
    %655 = vmatpush.bf16.msra.mxu0 0
    %656 = vmatpush.bf16.msra.mxu0 0
    %657 = vmatpush.bf16.msra.mxu0 0
    %658 = vmatpush.bf16.msra.mxu0 0
    %659 = vmatpush.bf16.msra.mxu0 0
    %660 = vmatpush.bf16.msra.mxu0 0
    %661 = vmatpush.bf16.msra.mxu0 0
    %662 = vmatpush.bf16.msra.mxu0 %v653
    %663 = vmatmul.bf16.gmra.mxu0 %v650
    %v664 = vpop.f32.mrf.mxu0
    %v665 = vadd.f32 0.0, %v664
    %v666 = vpop.f32.mrf.mxu0
    %667 = vdwg.mxu0
    %v668 = vpack.c.bf16 %v665, %v644
    %v670 = vsel %vm130, %v668, 0
    %v673 = vsel %vm213, %v70, 0
    %675 = vmatpush.bf16.msra.mxu0 0
    %676 = vmatpush.bf16.msra.mxu0 0
    %677 = vmatpush.bf16.msra.mxu0 0
    %678 = vmatpush.bf16.msra.mxu0 0
    %679 = vmatpush.bf16.msra.mxu0 0
    %680 = vmatpush.bf16.msra.mxu0 0
    %681 = vmatpush.bf16.msra.mxu0 0
    %682 = vmatpush.bf16.msra.mxu0 %v673
    %683 = vmatmul.bf16.gmra.mxu0 %v670
    %v684 = vpop.f32.mrf.mxu0
    %v685 = vadd.f32 0.0, %v684
    %v686 = vpop.f32.mrf.mxu0
    %v687 = vadd.f32 0.0, %v686
    %688 = vdwg.mxu0
    %v689 = vadd.f32 %v550, %v685
    %v690 = vadd.f32 %v551, %v687
    %v691 = vadd.f32 %v57, %v689
    %v692 = vadd.f32 %v58, %v690
    %v693 = vld [vmem:[%s7] sm:$0x1]
    %v694 = vld [vmem:[%s8] sm:$0x1]
    %v695 = vsel %vm102, %v691, 0.0
    %696 = vadd.xlane.f32.xlu0 %v695
    %v697 = vpop.xlane.xlu0 %696
    %v698 = vsel %vm102, %v692, 0.0
    %699 = vadd.xlane.f32.xlu0 %v698
    %v700 = vpop.xlane.xlu0 %699
    %v701 = vrcp.pop 32.0
    %v702 = vmul.f32 32.0, %v701
    %v703 = vsub.f32 1.0, %v702
    %v704 = vmul.f32 %v701, %v703
    %v705 = vadd.f32 %v701, %v704
    %vm706 = vweird.f32 %v701
    %v707 = vsel %vm706, %v701, %v705
    %v708 = vmul.f32 %v697, %v707
    %v709 = vmul.f32 %v700, %v707
    %v710 = vsub.f32 %v691, %v708
    %v711 = vsub.f32 %v692, %v709
    %v712 = vmul.f32 %v710, %v710
    %v713 = vmul.f32 %v711, %v711
    %v714 = vsel %vm102, %v712, 0.0
    %715 = vadd.xlane.f32.xlu0 %v714
    %v716 = vpop.xlane.xlu0 %715
    %v717 = vsel %vm102, %v713, 0.0
    %718 = vadd.xlane.f32.xlu0 %v717
    %v719 = vpop.xlane.xlu0 %718
    %v720 = vmul.f32 %v716, %v707
    %v721 = vmul.f32 %v719, %v707
    %v722 = vadd.f32 %v720, 1e-05
    %v723 = vadd.f32 %v721, 1e-05
    %v724 = vrsqrt.pop %v722
    %v725 = vmul.f32 %v724, %v722
    %v726 = vmul.f32 %v725, %v724
    %v727 = vmul.f32 0.5, %v726
    %v728 = vsub.f32 1.5, %v727
    %v729 = vmul.f32 %v724, %v728
    %vm730 = vweird.f32 %v722
    %vm731 = vweird.f32 %v724
    %vm732 = vmor %vm730, %vm731
    %v733 = vsel %vm732, %v724, %v729
    %v734 = vrsqrt.pop %v723
    %v735 = vmul.f32 %v734, %v723
    %v736 = vmul.f32 %v735, %v734
    %v737 = vmul.f32 0.5, %v736
    %v738 = vsub.f32 1.5, %v737
    %v739 = vmul.f32 %v734, %v738
    %vm740 = vweird.f32 %v723
    %vm741 = vweird.f32 %v734
    %vm742 = vmor %vm740, %vm741
    %v743 = vsel %vm742, %v734, %v739
    %v744 = vmul.f32 %v710, %v733
    %v745 = vmul.f32 %v711, %v743
    %v747 = vperm.slane %v693, 0
    %v749 = vmul.f32 %v744, %v747
    %v750 = vmul.f32 %v745, %v747
    %v752 = vperm.slane %v694, 0
    %v754 = vadd.f32 %v749, %v752
    %v755 = vadd.f32 %v750, %v752
    %v756 = vpack.c.bf16 %v755, %v754
    %v758 = vperm.slane %v76, 0
    %v764 = vunpack.c.l.b16 %v72
    %v765 = vunpack.c.l.b16 %v73
    %v766 = vunpack.c.l.b16 %v74
    %v767 = vunpack.c.l.b16 %v75
    %v768 = vpack.c.b16 %v765, %v764
    %v769 = vpack.c.b16 %v767, %v766
    %v773 = vsel %vm102, %v756, 0
    %775 = vmatpush.bf16.msra.mxu0 0
    %776 = vmatpush.bf16.msra.mxu0 0
    %777 = vmatpush.bf16.msra.mxu0 0
    %778 = vmatpush.bf16.msra.mxu0 0
    %779 = vmatpush.bf16.msra.mxu0 0
    %780 = vmatpush.bf16.msra.mxu0 0
    %781 = vmatpush.bf16.msra.mxu0 %v769
    %782 = vmatpush.bf16.msra.mxu0 %v768
    %783 = vmatmul.bf16.gmra.mxu0 %v773
    %v784 = vpop.f32.mrf.mxu0
    %v785 = vadd.f32 %v758, %v784
    %v786 = vpop.f32.mrf.mxu0
    %v787 = vadd.f32 %v758, %v786
    %788 = vdwg.mxu0
    %v789 = vmax.f32 %v785, 0.0
    %v790 = vmax.f32 %v787, 0.0
    %v791 = vpack.c.bf16 %v790, %v789
    %v793 = vperm.slane %v85, 0
    %v803 = vunpack.c.l.b16 %v77
    %v804 = vunpack.c.l.b16 %v78
    %v805 = vunpack.c.l.b16 %v79
    %v806 = vunpack.c.l.b16 %v80
    %v807 = vunpack.c.l.b16 %v81
    %v808 = vunpack.c.l.b16 %v82
    %v809 = vunpack.c.l.b16 %v83
    %v810 = vunpack.c.l.b16 %v84
    %v811 = vpack.c.b16 %v804, %v803
    %v812 = vpack.c.b16 %v806, %v805
    %v813 = vpack.c.b16 %v808, %v807
    %v814 = vpack.c.b16 %v810, %v809
    %vm819 = vcmask 523264
    %v821 = vsel %vm819, %v791, 0
    %823 = vmatpush.bf16.msra.mxu0 0
    %824 = vmatpush.bf16.msra.mxu0 0
    %825 = vmatpush.bf16.msra.mxu0 0
    %826 = vmatpush.bf16.msra.mxu0 0
    %827 = vmatpush.bf16.msra.mxu0 %v814
    %828 = vmatpush.bf16.msra.mxu0 %v813
    %829 = vmatpush.bf16.msra.mxu0 %v812
    %830 = vmatpush.bf16.msra.mxu0 %v811
    %831 = vmatmul.bf16.gmra.mxu0 %v821
    %v832 = vpop.f32.mrf.mxu0
    %v833 = vadd.f32 %v793, %v832
    %v834 = vpop.f32.mrf.mxu0
    %v835 = vadd.f32 %v793, %v834
    %836 = vdwg.mxu0
    %v837 = vadd.f32 %v754, %v833
    %v838 = vadd.f32 %v755, %v835
    %v839 = vld [vmem:[%s13] sm:$0x1]
    %v840 = vld [vmem:[%s14] sm:$0x1]
    %v841 = vsel %vm102, %v837, 0.0
    %842 = vadd.xlane.f32.xlu0 %v841
    %v843 = vpop.xlane.xlu0 %842
    %v844 = vsel %vm102, %v838, 0.0
    %845 = vadd.xlane.f32.xlu0 %v844
    %v846 = vpop.xlane.xlu0 %845
    %v847 = vmul.f32 %v843, %v707
    %v848 = vmul.f32 %v846, %v707
    %v849 = vsub.f32 %v837, %v847
    %v850 = vsub.f32 %v838, %v848
    %v851 = vmul.f32 %v849, %v849
    %v852 = vmul.f32 %v850, %v850
    %v853 = vsel %vm102, %v851, 0.0
    %854 = vadd.xlane.f32.xlu0 %v853
    %v855 = vpop.xlane.xlu0 %854
    %v856 = vsel %vm102, %v852, 0.0
    %857 = vadd.xlane.f32.xlu0 %v856
    %v858 = vpop.xlane.xlu0 %857
    %v859 = vmul.f32 %v855, %v707
    %v860 = vmul.f32 %v858, %v707
    %v861 = vadd.f32 %v859, 1e-05
    %v862 = vadd.f32 %v860, 1e-05
    %v863 = vrsqrt.pop %v861
    %v864 = vmul.f32 %v863, %v861
    %v865 = vmul.f32 %v864, %v863
    %v866 = vmul.f32 0.5, %v865
    %v867 = vsub.f32 1.5, %v866
    %v868 = vmul.f32 %v863, %v867
    %vm869 = vweird.f32 %v861
    %vm870 = vweird.f32 %v863
    %vm871 = vmor %vm869, %vm870
    %v872 = vsel %vm871, %v863, %v868
    %v873 = vrsqrt.pop %v862
    %v874 = vmul.f32 %v873, %v862
    %v875 = vmul.f32 %v874, %v873
    %v876 = vmul.f32 0.5, %v875
    %v877 = vsub.f32 1.5, %v876
    %v878 = vmul.f32 %v873, %v877
    %vm879 = vweird.f32 %v862
    %vm880 = vweird.f32 %v873
    %vm881 = vmor %vm879, %vm880
    %v882 = vsel %vm881, %v873, %v878
    %v883 = vmul.f32 %v849, %v872
    %v884 = vmul.f32 %v850, %v882
    %v886 = vperm.slane %v839, 0
    %v888 = vmul.f32 %v883, %v886
    %v889 = vmul.f32 %v884, %v886
    %v891 = vperm.slane %v840, 0
    %v893 = vadd.f32 %v888, %v891
    %v894 = vadd.f32 %v889, %v891
    %s895 = scalar_lea.vmem %s3, 16
    %v896 = vld [vmem:[%s895] sm:$0xf]
    %v897 = vld [vmem:[%s895 + $0x4] sm:$0xf]
    %v898 = vld [vmem:[%s895 + $0x8] sm:$0xf]
    %v899 = vld [vmem:[%s895 + $0xc] sm:$0xf]
    %s900 = scalar_lea.vmem %s4, 1
    %v901 = vld [vmem:[%s900] sm:$0x1]
    %s902 = scalar_lea.vmem %s5, 16
    %v903 = vld [vmem:[%s902] sm:$0xf]
    %v904 = vld [vmem:[%s902 + $0x4] sm:$0xf]
    %v905 = vld [vmem:[%s902 + $0x8] sm:$0xf]
    %v906 = vld [vmem:[%s902 + $0xc] sm:$0xf]
    %s907 = scalar_lea.vmem %s6, 1
    %v908 = vld [vmem:[%s907] sm:$0x1]
    %s909 = scalar_lea.vmem %s9, 16
    %v910 = vld [vmem:[%s909] sm:$0xf]
    %v911 = vld [vmem:[%s909 + $0x4] sm:$0xf]
    %v912 = vld [vmem:[%s909 + $0x8] sm:$0xf]
    %v913 = vld [vmem:[%s909 + $0xc] sm:$0xf]
    %s914 = scalar_lea.vmem %s10, 1
    %v915 = vld [vmem:[%s914] sm:$0x1]
    %s916 = scalar_lea.vmem %s11, 32
    %v917 = vld [vmem:[%s916] sm:$0xf]
    %v918 = vld [vmem:[%s916 + $0x4] sm:$0xf]
    %v919 = vld [vmem:[%s916 + $0x8] sm:$0xf]
    %v920 = vld [vmem:[%s916 + $0xc] sm:$0xf]
    %v921 = vld [vmem:[%s916 + $0x10] sm:$0xf]
    %v922 = vld [vmem:[%s916 + $0x14] sm:$0xf]
    %v923 = vld [vmem:[%s916 + $0x18] sm:$0xf]
    %v924 = vld [vmem:[%s916 + $0x1c] sm:$0xf]
    %s925 = scalar_lea.vmem %s12, 1
    %v926 = vld [vmem:[%s925] sm:$0x1]
    %v927 = vpack.c.bf16 %v894, %v893
    %v929 = vperm.slane %v901, 0
    %v935 = vunpack.c.l.b16 %v896
    %v936 = vunpack.c.l.b16 %v897
    %v937 = vunpack.c.l.b16 %v898
    %v938 = vunpack.c.l.b16 %v899
    %v939 = vpack.c.b16 %v936, %v935
    %v940 = vpack.c.b16 %v938, %v937
    %v944 = vsel %vm102, %v927, 0
    %946 = vmatpush.bf16.msra.mxu0 0
    %947 = vmatpush.bf16.msra.mxu0 0
    %948 = vmatpush.bf16.msra.mxu0 0
    %949 = vmatpush.bf16.msra.mxu0 0
    %950 = vmatpush.bf16.msra.mxu0 0
    %951 = vmatpush.bf16.msra.mxu0 0
    %952 = vmatpush.bf16.msra.mxu0 %v940
    %953 = vmatpush.bf16.msra.mxu0 %v939
    %954 = vmatmul.bf16.gmra.mxu0 %v944
    %v955 = vpop.f32.mrf.mxu0
    %v956 = vadd.f32 %v929, %v955
    %v957 = vpop.f32.mrf.mxu0
    %v958 = vadd.f32 %v929, %v957
    %959 = vdwg.mxu0
    %v961 = vperm.slane %v908, 0
    %v963 = vpack.c.bf16 %v956, %v956
    %v964 = vpack.c.bf16 %v958, %v958
    %v966 = vunpack.c.l.b16 %v963
    %v967 = vpack.c.b16 %v966, %v966
    %968 = vrot.lane.b32.xlu0 %v967, 96
    %v969 = vpop.permute.xlu0 %968
    %v971 = vsel %vm130, %v963, 0
    %v974 = vsel %vm130, %v969, 0
    %976 = vmatpush.bf16.xpose.msra.mxu0 0
    %977 = vmatpush.bf16.xpose.msra.mxu0 0
    %978 = vmatpush.bf16.xpose.msra.mxu0 0
    %979 = vmatpush.bf16.xpose.msra.mxu0 0
    %980 = vmatpush.bf16.xpose.msra.mxu0 0
    %981 = vmatpush.bf16.xpose.msra.mxu0 0
    %982 = vmatpush.bf16.xpose.msra.mxu0 0
    %983 = vmatpush.bf16.xpose.msra.mxu0 %v974
    %984 = vmatmul.bf16.gmra.mxu0 %v971
    %v985 = vpop.f32.mrf.mxu0
    %v986 = vadd.f32 0.0, %v985
    %v987 = vpop.f32.mrf.mxu0
    %988 = vdwg.mxu0
    %v990 = vunpack.c.l.b16 %v964
    %v991 = vpack.c.b16 %v990, %v990
    %992 = vrot.lane.b32.xlu0 %v991, 96
    %v993 = vpop.permute.xlu0 %992
    %v995 = vsel %vm130, %v964, 0
    %v998 = vsel %vm130, %v993, 0
    %1000 = vmatpush.bf16.xpose.msra.mxu0 0
    %1001 = vmatpush.bf16.xpose.msra.mxu0 0
    %1002 = vmatpush.bf16.xpose.msra.mxu0 0
    %1003 = vmatpush.bf16.xpose.msra.mxu0 0
    %1004 = vmatpush.bf16.xpose.msra.mxu0 0
    %1005 = vmatpush.bf16.xpose.msra.mxu0 0
    %1006 = vmatpush.bf16.xpose.msra.mxu0 0
    %1007 = vmatpush.bf16.xpose.msra.mxu0 %v998
    %1008 = vmatmul.bf16.gmra.mxu0 %v995
    %v1009 = vpop.f32.mrf.mxu0
    %v1010 = vadd.f32 0.0, %v1009
    %v1011 = vpop.f32.mrf.mxu0
    %1012 = vdwg.mxu0
    %v1013 = vmul.f32 %v986, 0.35355338
    %v1014 = vmul.f32 %v1010, 0.35355338
    %v1015 = vadd.f32 %v1013, %v178
    %v1016 = vadd.f32 %v1014, %v179
    %v1017 = vsel %vm130, %v1015, -inf
    %1018 = vmax.xlane.f32.xlu0 %v1017
    %v1019 = vpop.xlane.xlu0 %1018
    %v1020 = vsel %vm130, %v1016, -inf
    %1021 = vmax.xlane.f32.xlu0 %v1020
    %v1022 = vpop.xlane.xlu0 %1021
    %v1023 = vsub.f32 %v1015, %v1019
    %v1024 = vsub.f32 %v1016, %v1022
    %v1025 = vmul.f32 %v1023, 1.442695
    %v1026 = vpow.pop %v1025
    %v1027 = vmul.f32 %v1024, 1.442695
    %v1028 = vpow.pop %v1027
    %v1029 = vsel %vm130, %v1026, 0.0
    %1030 = vadd.xlane.f32.xlu0 %v1029
    %v1031 = vpop.xlane.xlu0 %1030
    %v1032 = vsel %vm130, %v1028, 0.0
    %1033 = vadd.xlane.f32.xlu0 %v1032
    %v1034 = vpop.xlane.xlu0 %1033
    %v1035 = vrcp.pop %v1031
    %v1036 = vrcp.pop %v1034
    %v1037 = vmul.f32 %v1026, %v1035
    %v1038 = vmul.f32 %v1028, %v1036
    %v1039 = vpack.c.bf16 %v1037, %v1037
    %v1040 = vpack.c.bf16 %v1038, %v1038
    %1041 = vrot.lane.b32.xlu0 %v967, 64
    %v1042 = vpop.permute.xlu0 %1041
    %v1044 = vsel %vm130, %v1039, 0
    %v1047 = vsel %vm213, %v1042, 0
    %1049 = vmatpush.bf16.msra.mxu0 0
    %1050 = vmatpush.bf16.msra.mxu0 0
    %1051 = vmatpush.bf16.msra.mxu0 0
    %1052 = vmatpush.bf16.msra.mxu0 0
    %1053 = vmatpush.bf16.msra.mxu0 0
    %1054 = vmatpush.bf16.msra.mxu0 0
    %1055 = vmatpush.bf16.msra.mxu0 0
    %1056 = vmatpush.bf16.msra.mxu0 %v1047
    %1057 = vmatmul.bf16.gmra.mxu0 %v1044
    %v1058 = vpop.f32.mrf.mxu0
    %v1059 = vadd.f32 0.0, %v1058
    %v1060 = vpop.f32.mrf.mxu0
    %1061 = vdwg.mxu0
    %1062 = vrot.lane.b32.xlu0 %v991, 64
    %v1063 = vpop.permute.xlu0 %1062
    %v1065 = vsel %vm130, %v1040, 0
    %v1068 = vsel %vm213, %v1063, 0
    %1070 = vmatpush.bf16.msra.mxu0 0
    %1071 = vmatpush.bf16.msra.mxu0 0
    %1072 = vmatpush.bf16.msra.mxu0 0
    %1073 = vmatpush.bf16.msra.mxu0 0
    %1074 = vmatpush.bf16.msra.mxu0 0
    %1075 = vmatpush.bf16.msra.mxu0 0
    %1076 = vmatpush.bf16.msra.mxu0 0
    %1077 = vmatpush.bf16.msra.mxu0 %v1068
    %1078 = vmatmul.bf16.gmra.mxu0 %v1065
    %v1079 = vpop.f32.mrf.mxu0
    %v1080 = vadd.f32 0.0, %v1079
    %v1081 = vpop.f32.mrf.mxu0
    %1082 = vdwg.mxu0
    %v1083 = vpack.c.bf16 %v1080, %v1059
    %v1085 = vsel %vm130, %v1083, 0
    %v1088 = vsel %vm213, %v903, 0
    %1090 = vmatpush.bf16.msra.mxu0 0
    %1091 = vmatpush.bf16.msra.mxu0 0
    %1092 = vmatpush.bf16.msra.mxu0 0
    %1093 = vmatpush.bf16.msra.mxu0 0
    %1094 = vmatpush.bf16.msra.mxu0 0
    %1095 = vmatpush.bf16.msra.mxu0 0
    %1096 = vmatpush.bf16.msra.mxu0 0
    %1097 = vmatpush.bf16.msra.mxu0 %v1088
    %1098 = vmatmul.bf16.gmra.mxu0 %v1085
    %v1099 = vpop.f32.mrf.mxu0
    %v1100 = vadd.f32 0.0, %v1099
    %v1101 = vpop.f32.mrf.mxu0
    %v1102 = vadd.f32 0.0, %v1101
    %1103 = vdwg.mxu0
    %v1104 = vadd.f32 %v961, %v1100
    %v1105 = vadd.f32 %v961, %v1102
    %1106 = vrot.lane.b32.xlu0 %v967, 120
    %v1107 = vpop.permute.xlu0 %1106
    %1108 = vrot.lane.b32.xlu0 %v967, 88
    %v1109 = vpop.permute.xlu0 %1108
    %v1111 = vsel %vm130, %v1107, 0
    %v1114 = vsel %vm130, %v1109, 0
    %1116 = vmatpush.bf16.xpose.msra.mxu0 0
    %1117 = vmatpush.bf16.xpose.msra.mxu0 0
    %1118 = vmatpush.bf16.xpose.msra.mxu0 0
    %1119 = vmatpush.bf16.xpose.msra.mxu0 0
    %1120 = vmatpush.bf16.xpose.msra.mxu0 0
    %1121 = vmatpush.bf16.xpose.msra.mxu0 0
    %1122 = vmatpush.bf16.xpose.msra.mxu0 0
    %1123 = vmatpush.bf16.xpose.msra.mxu0 %v1114
    %1124 = vmatmul.bf16.gmra.mxu0 %v1111
    %v1125 = vpop.f32.mrf.mxu0
    %v1126 = vadd.f32 0.0, %v1125
    %v1127 = vpop.f32.mrf.mxu0
    %1128 = vdwg.mxu0
    %1129 = vrot.lane.b32.xlu0 %v991, 120
    %v1130 = vpop.permute.xlu0 %1129
    %1131 = vrot.lane.b32.xlu0 %v991, 88
    %v1132 = vpop.permute.xlu0 %1131
    %v1134 = vsel %vm130, %v1130, 0
    %v1137 = vsel %vm130, %v1132, 0
    %1139 = vmatpush.bf16.xpose.msra.mxu0 0
    %1140 = vmatpush.bf16.xpose.msra.mxu0 0
    %1141 = vmatpush.bf16.xpose.msra.mxu0 0
    %1142 = vmatpush.bf16.xpose.msra.mxu0 0
    %1143 = vmatpush.bf16.xpose.msra.mxu0 0
    %1144 = vmatpush.bf16.xpose.msra.mxu0 0
    %1145 = vmatpush.bf16.xpose.msra.mxu0 0
    %1146 = vmatpush.bf16.xpose.msra.mxu0 %v1137
    %1147 = vmatmul.bf16.gmra.mxu0 %v1134
    %v1148 = vpop.f32.mrf.mxu0
    %v1149 = vadd.f32 0.0, %v1148
    %v1150 = vpop.f32.mrf.mxu0
    %1151 = vdwg.mxu0
    %v1152 = vmul.f32 %v1126, 0.35355338
    %v1153 = vmul.f32 %v1149, 0.35355338
    %v1154 = vadd.f32 %v1152, %v178
    %v1155 = vadd.f32 %v1153, %v179
    %v1156 = vsel %vm130, %v1154, -inf
    %1157 = vmax.xlane.f32.xlu0 %v1156
    %v1158 = vpop.xlane.xlu0 %1157
    %v1159 = vsel %vm130, %v1155, -inf
    %1160 = vmax.xlane.f32.xlu0 %v1159
    %v1161 = vpop.xlane.xlu0 %1160
    %v1162 = vsub.f32 %v1154, %v1158
    %v1163 = vsub.f32 %v1155, %v1161
    %v1164 = vmul.f32 %v1162, 1.442695
    %v1165 = vpow.pop %v1164
    %v1166 = vmul.f32 %v1163, 1.442695
    %v1167 = vpow.pop %v1166
    %v1168 = vsel %vm130, %v1165, 0.0
    %1169 = vadd.xlane.f32.xlu0 %v1168
    %v1170 = vpop.xlane.xlu0 %1169
    %v1171 = vsel %vm130, %v1167, 0.0
    %1172 = vadd.xlane.f32.xlu0 %v1171
    %v1173 = vpop.xlane.xlu0 %1172
    %v1174 = vrcp.pop %v1170
    %v1175 = vrcp.pop %v1173
    %v1176 = vmul.f32 %v1165, %v1174
    %v1177 = vmul.f32 %v1167, %v1175
    %v1178 = vpack.c.bf16 %v1176, %v1176
    %v1179 = vpack.c.bf16 %v1177, %v1177
    %1180 = vrot.lane.b32.xlu0 %v967, 56
    %v1181 = vpop.permute.xlu0 %1180
    %v1183 = vsel %vm130, %v1178, 0
    %v1186 = vsel %vm213, %v1181, 0
    %1188 = vmatpush.bf16.msra.mxu0 0
    %1189 = vmatpush.bf16.msra.mxu0 0
    %1190 = vmatpush.bf16.msra.mxu0 0
    %1191 = vmatpush.bf16.msra.mxu0 0
    %1192 = vmatpush.bf16.msra.mxu0 0
    %1193 = vmatpush.bf16.msra.mxu0 0
    %1194 = vmatpush.bf16.msra.mxu0 0
    %1195 = vmatpush.bf16.msra.mxu0 %v1186
    %1196 = vmatmul.bf16.gmra.mxu0 %v1183
    %v1197 = vpop.f32.mrf.mxu0
    %v1198 = vadd.f32 0.0, %v1197
    %v1199 = vpop.f32.mrf.mxu0
    %1200 = vdwg.mxu0
    %1201 = vrot.lane.b32.xlu0 %v991, 56
    %v1202 = vpop.permute.xlu0 %1201
    %v1204 = vsel %vm130, %v1179, 0
    %v1207 = vsel %vm213, %v1202, 0
    %1209 = vmatpush.bf16.msra.mxu0 0
    %1210 = vmatpush.bf16.msra.mxu0 0
    %1211 = vmatpush.bf16.msra.mxu0 0
    %1212 = vmatpush.bf16.msra.mxu0 0
    %1213 = vmatpush.bf16.msra.mxu0 0
    %1214 = vmatpush.bf16.msra.mxu0 0
    %1215 = vmatpush.bf16.msra.mxu0 0
    %1216 = vmatpush.bf16.msra.mxu0 %v1207
    %1217 = vmatmul.bf16.gmra.mxu0 %v1204
    %v1218 = vpop.f32.mrf.mxu0
    %v1219 = vadd.f32 0.0, %v1218
    %v1220 = vpop.f32.mrf.mxu0
    %1221 = vdwg.mxu0
    %v1222 = vpack.c.bf16 %v1219, %v1198
    %v1224 = vsel %vm130, %v1222, 0
    %v1227 = vsel %vm213, %v904, 0
    %1229 = vmatpush.bf16.msra.mxu0 0
    %1230 = vmatpush.bf16.msra.mxu0 0
    %1231 = vmatpush.bf16.msra.mxu0 0
    %1232 = vmatpush.bf16.msra.mxu0 0
    %1233 = vmatpush.bf16.msra.mxu0 0
    %1234 = vmatpush.bf16.msra.mxu0 0
    %1235 = vmatpush.bf16.msra.mxu0 0
    %1236 = vmatpush.bf16.msra.mxu0 %v1227
    %1237 = vmatmul.bf16.gmra.mxu0 %v1224
    %v1238 = vpop.f32.mrf.mxu0
    %v1239 = vadd.f32 0.0, %v1238
    %v1240 = vpop.f32.mrf.mxu0
    %v1241 = vadd.f32 0.0, %v1240
    %1242 = vdwg.mxu0
    %v1243 = vadd.f32 %v1104, %v1239
    %v1244 = vadd.f32 %v1105, %v1241
    %1245 = vrot.lane.b32.xlu0 %v967, 112
    %v1246 = vpop.permute.xlu0 %1245
    %1247 = vrot.lane.b32.xlu0 %v967, 80
    %v1248 = vpop.permute.xlu0 %1247
    %v1250 = vsel %vm130, %v1246, 0
    %v1253 = vsel %vm130, %v1248, 0
    %1255 = vmatpush.bf16.xpose.msra.mxu0 0
    %1256 = vmatpush.bf16.xpose.msra.mxu0 0
    %1257 = vmatpush.bf16.xpose.msra.mxu0 0
    %1258 = vmatpush.bf16.xpose.msra.mxu0 0
    %1259 = vmatpush.bf16.xpose.msra.mxu0 0
    %1260 = vmatpush.bf16.xpose.msra.mxu0 0
    %1261 = vmatpush.bf16.xpose.msra.mxu0 0
    %1262 = vmatpush.bf16.xpose.msra.mxu0 %v1253
    %1263 = vmatmul.bf16.gmra.mxu0 %v1250
    %v1264 = vpop.f32.mrf.mxu0
    %v1265 = vadd.f32 0.0, %v1264
    %v1266 = vpop.f32.mrf.mxu0
    %1267 = vdwg.mxu0
    %1268 = vrot.lane.b32.xlu0 %v991, 112
    %v1269 = vpop.permute.xlu0 %1268
    %1270 = vrot.lane.b32.xlu0 %v991, 80
    %v1271 = vpop.permute.xlu0 %1270
    %v1273 = vsel %vm130, %v1269, 0
    %v1276 = vsel %vm130, %v1271, 0
    %1278 = vmatpush.bf16.xpose.msra.mxu0 0
    %1279 = vmatpush.bf16.xpose.msra.mxu0 0
    %1280 = vmatpush.bf16.xpose.msra.mxu0 0
    %1281 = vmatpush.bf16.xpose.msra.mxu0 0
    %1282 = vmatpush.bf16.xpose.msra.mxu0 0
    %1283 = vmatpush.bf16.xpose.msra.mxu0 0
    %1284 = vmatpush.bf16.xpose.msra.mxu0 0
    %1285 = vmatpush.bf16.xpose.msra.mxu0 %v1276
    %1286 = vmatmul.bf16.gmra.mxu0 %v1273
    %v1287 = vpop.f32.mrf.mxu0
    %v1288 = vadd.f32 0.0, %v1287
    %v1289 = vpop.f32.mrf.mxu0
    %1290 = vdwg.mxu0
    %v1291 = vmul.f32 %v1265, 0.35355338
    %v1292 = vmul.f32 %v1288, 0.35355338
    %v1293 = vadd.f32 %v1291, %v178
    %v1294 = vadd.f32 %v1292, %v179
    %v1295 = vsel %vm130, %v1293, -inf
    %1296 = vmax.xlane.f32.xlu0 %v1295
    %v1297 = vpop.xlane.xlu0 %1296
    %v1298 = vsel %vm130, %v1294, -inf
    %1299 = vmax.xlane.f32.xlu0 %v1298
    %v1300 = vpop.xlane.xlu0 %1299
    %v1301 = vsub.f32 %v1293, %v1297
    %v1302 = vsub.f32 %v1294, %v1300
    %v1303 = vmul.f32 %v1301, 1.442695
    %v1304 = vpow.pop %v1303
    %v1305 = vmul.f32 %v1302, 1.442695
    %v1306 = vpow.pop %v1305
    %v1307 = vsel %vm130, %v1304, 0.0
    %1308 = vadd.xlane.f32.xlu0 %v1307
    %v1309 = vpop.xlane.xlu0 %1308
    %v1310 = vsel %vm130, %v1306, 0.0
    %1311 = vadd.xlane.f32.xlu0 %v1310
    %v1312 = vpop.xlane.xlu0 %1311
    %v1313 = vrcp.pop %v1309
    %v1314 = vrcp.pop %v1312
    %v1315 = vmul.f32 %v1304, %v1313
    %v1316 = vmul.f32 %v1306, %v1314
    %v1317 = vpack.c.bf16 %v1315, %v1315
    %v1318 = vpack.c.bf16 %v1316, %v1316
    %1319 = vrot.lane.b32.xlu0 %v967, 48
    %v1320 = vpop.permute.xlu0 %1319
    %v1322 = vsel %vm130, %v1317, 0
    %v1325 = vsel %vm213, %v1320, 0
    %1327 = vmatpush.bf16.msra.mxu0 0
    %1328 = vmatpush.bf16.msra.mxu0 0
    %1329 = vmatpush.bf16.msra.mxu0 0
    %1330 = vmatpush.bf16.msra.mxu0 0
    %1331 = vmatpush.bf16.msra.mxu0 0
    %1332 = vmatpush.bf16.msra.mxu0 0
    %1333 = vmatpush.bf16.msra.mxu0 0
    %1334 = vmatpush.bf16.msra.mxu0 %v1325
    %1335 = vmatmul.bf16.gmra.mxu0 %v1322
    %v1336 = vpop.f32.mrf.mxu0
    %v1337 = vadd.f32 0.0, %v1336
    %v1338 = vpop.f32.mrf.mxu0
    %1339 = vdwg.mxu0
    %1340 = vrot.lane.b32.xlu0 %v991, 48
    %v1341 = vpop.permute.xlu0 %1340
    %v1343 = vsel %vm130, %v1318, 0
    %v1346 = vsel %vm213, %v1341, 0
    %1348 = vmatpush.bf16.msra.mxu0 0
    %1349 = vmatpush.bf16.msra.mxu0 0
    %1350 = vmatpush.bf16.msra.mxu0 0
    %1351 = vmatpush.bf16.msra.mxu0 0
    %1352 = vmatpush.bf16.msra.mxu0 0
    %1353 = vmatpush.bf16.msra.mxu0 0
    %1354 = vmatpush.bf16.msra.mxu0 0
    %1355 = vmatpush.bf16.msra.mxu0 %v1346
    %1356 = vmatmul.bf16.gmra.mxu0 %v1343
    %v1357 = vpop.f32.mrf.mxu0
    %v1358 = vadd.f32 0.0, %v1357
    %v1359 = vpop.f32.mrf.mxu0
    %1360 = vdwg.mxu0
    %v1361 = vpack.c.bf16 %v1358, %v1337
    %v1363 = vsel %vm130, %v1361, 0
    %v1366 = vsel %vm213, %v905, 0
    %1368 = vmatpush.bf16.msra.mxu0 0
    %1369 = vmatpush.bf16.msra.mxu0 0
    %1370 = vmatpush.bf16.msra.mxu0 0
    %1371 = vmatpush.bf16.msra.mxu0 0
    %1372 = vmatpush.bf16.msra.mxu0 0
    %1373 = vmatpush.bf16.msra.mxu0 0
    %1374 = vmatpush.bf16.msra.mxu0 0
    %1375 = vmatpush.bf16.msra.mxu0 %v1366
    %1376 = vmatmul.bf16.gmra.mxu0 %v1363
    %v1377 = vpop.f32.mrf.mxu0
    %v1378 = vadd.f32 0.0, %v1377
    %v1379 = vpop.f32.mrf.mxu0
    %v1380 = vadd.f32 0.0, %v1379
    %1381 = vdwg.mxu0
    %v1382 = vadd.f32 %v1243, %v1378
    %v1383 = vadd.f32 %v1244, %v1380
    %1384 = vrot.lane.b32.xlu0 %v967, 104
    %v1385 = vpop.permute.xlu0 %1384
    %1386 = vrot.lane.b32.xlu0 %v967, 72
    %v1387 = vpop.permute.xlu0 %1386
    %v1389 = vsel %vm130, %v1385, 0
    %v1392 = vsel %vm130, %v1387, 0
    %1394 = vmatpush.bf16.xpose.msra.mxu0 0
    %1395 = vmatpush.bf16.xpose.msra.mxu0 0
    %1396 = vmatpush.bf16.xpose.msra.mxu0 0
    %1397 = vmatpush.bf16.xpose.msra.mxu0 0
    %1398 = vmatpush.bf16.xpose.msra.mxu0 0
    %1399 = vmatpush.bf16.xpose.msra.mxu0 0
    %1400 = vmatpush.bf16.xpose.msra.mxu0 0
    %1401 = vmatpush.bf16.xpose.msra.mxu0 %v1392
    %1402 = vmatmul.bf16.gmra.mxu0 %v1389
    %v1403 = vpop.f32.mrf.mxu0
    %v1404 = vadd.f32 0.0, %v1403
    %v1405 = vpop.f32.mrf.mxu0
    %1406 = vdwg.mxu0
    %1407 = vrot.lane.b32.xlu0 %v991, 104
    %v1408 = vpop.permute.xlu0 %1407
    %1409 = vrot.lane.b32.xlu0 %v991, 72
    %v1410 = vpop.permute.xlu0 %1409
    %v1412 = vsel %vm130, %v1408, 0
    %v1415 = vsel %vm130, %v1410, 0
    %1417 = vmatpush.bf16.xpose.msra.mxu0 0
    %1418 = vmatpush.bf16.xpose.msra.mxu0 0
    %1419 = vmatpush.bf16.xpose.msra.mxu0 0
    %1420 = vmatpush.bf16.xpose.msra.mxu0 0
    %1421 = vmatpush.bf16.xpose.msra.mxu0 0
    %1422 = vmatpush.bf16.xpose.msra.mxu0 0
    %1423 = vmatpush.bf16.xpose.msra.mxu0 0
    %1424 = vmatpush.bf16.xpose.msra.mxu0 %v1415
    %1425 = vmatmul.bf16.gmra.mxu0 %v1412
    %v1426 = vpop.f32.mrf.mxu0
    %v1427 = vadd.f32 0.0, %v1426
    %v1428 = vpop.f32.mrf.mxu0
    %1429 = vdwg.mxu0
    %v1430 = vmul.f32 %v1404, 0.35355338
    %v1431 = vmul.f32 %v1427, 0.35355338
    %v1432 = vadd.f32 %v1430, %v178
    %v1433 = vadd.f32 %v1431, %v179
    %v1434 = vsel %vm130, %v1432, -inf
    %1435 = vmax.xlane.f32.xlu0 %v1434
    %v1436 = vpop.xlane.xlu0 %1435
    %v1437 = vsel %vm130, %v1433, -inf
    %1438 = vmax.xlane.f32.xlu0 %v1437
    %v1439 = vpop.xlane.xlu0 %1438
    %v1440 = vsub.f32 %v1432, %v1436
    %v1441 = vsub.f32 %v1433, %v1439
    %v1442 = vmul.f32 %v1440, 1.442695
    %v1443 = vpow.pop %v1442
    %v1444 = vmul.f32 %v1441, 1.442695
    %v1445 = vpow.pop %v1444
    %v1446 = vsel %vm130, %v1443, 0.0
    %1447 = vadd.xlane.f32.xlu0 %v1446
    %v1448 = vpop.xlane.xlu0 %1447
    %v1449 = vsel %vm130, %v1445, 0.0
    %1450 = vadd.xlane.f32.xlu0 %v1449
    %v1451 = vpop.xlane.xlu0 %1450
    %v1452 = vrcp.pop %v1448
    %v1453 = vrcp.pop %v1451
    %v1454 = vmul.f32 %v1443, %v1452
    %v1455 = vmul.f32 %v1445, %v1453
    %v1456 = vpack.c.bf16 %v1454, %v1454
    %v1457 = vpack.c.bf16 %v1455, %v1455
    %1458 = vrot.lane.b32.xlu0 %v967, 40
    %v1459 = vpop.permute.xlu0 %1458
    %v1461 = vsel %vm130, %v1456, 0
    %v1464 = vsel %vm213, %v1459, 0
    %1466 = vmatpush.bf16.msra.mxu0 0
    %1467 = vmatpush.bf16.msra.mxu0 0
    %1468 = vmatpush.bf16.msra.mxu0 0
    %1469 = vmatpush.bf16.msra.mxu0 0
    %1470 = vmatpush.bf16.msra.mxu0 0
    %1471 = vmatpush.bf16.msra.mxu0 0
    %1472 = vmatpush.bf16.msra.mxu0 0
    %1473 = vmatpush.bf16.msra.mxu0 %v1464
    %1474 = vmatmul.bf16.gmra.mxu0 %v1461
    %v1475 = vpop.f32.mrf.mxu0
    %v1476 = vadd.f32 0.0, %v1475
    %v1477 = vpop.f32.mrf.mxu0
    %1478 = vdwg.mxu0
    %1479 = vrot.lane.b32.xlu0 %v991, 40
    %v1480 = vpop.permute.xlu0 %1479
    %v1482 = vsel %vm130, %v1457, 0
    %v1485 = vsel %vm213, %v1480, 0
    %1487 = vmatpush.bf16.msra.mxu0 0
    %1488 = vmatpush.bf16.msra.mxu0 0
    %1489 = vmatpush.bf16.msra.mxu0 0
    %1490 = vmatpush.bf16.msra.mxu0 0
    %1491 = vmatpush.bf16.msra.mxu0 0
    %1492 = vmatpush.bf16.msra.mxu0 0
    %1493 = vmatpush.bf16.msra.mxu0 0
    %1494 = vmatpush.bf16.msra.mxu0 %v1485
    %1495 = vmatmul.bf16.gmra.mxu0 %v1482
    %v1496 = vpop.f32.mrf.mxu0
    %v1497 = vadd.f32 0.0, %v1496
    %v1498 = vpop.f32.mrf.mxu0
    %1499 = vdwg.mxu0
    %v1500 = vpack.c.bf16 %v1497, %v1476
    %v1502 = vsel %vm130, %v1500, 0
    %v1505 = vsel %vm213, %v906, 0
    %1507 = vmatpush.bf16.msra.mxu0 0
    %1508 = vmatpush.bf16.msra.mxu0 0
    %1509 = vmatpush.bf16.msra.mxu0 0
    %1510 = vmatpush.bf16.msra.mxu0 0
    %1511 = vmatpush.bf16.msra.mxu0 0
    %1512 = vmatpush.bf16.msra.mxu0 0
    %1513 = vmatpush.bf16.msra.mxu0 0
    %1514 = vmatpush.bf16.msra.mxu0 %v1505
    %1515 = vmatmul.bf16.gmra.mxu0 %v1502
    %v1516 = vpop.f32.mrf.mxu0
    %v1517 = vadd.f32 0.0, %v1516
    %v1518 = vpop.f32.mrf.mxu0
    %v1519 = vadd.f32 0.0, %v1518
    %1520 = vdwg.mxu0
    %v1521 = vadd.f32 %v1382, %v1517
    %v1522 = vadd.f32 %v1383, %v1519
    %v1523 = vadd.f32 %v893, %v1521
    %v1524 = vadd.f32 %v894, %v1522
    %s1525 = scalar_lea.vmem %s7, 1
    %v1526 = vld [vmem:[%s1525] sm:$0x1]
    %s1527 = scalar_lea.vmem %s8, 1
    %v1528 = vld [vmem:[%s1527] sm:$0x1]
    %v1529 = vsel %vm102, %v1523, 0.0
    %1530 = vadd.xlane.f32.xlu0 %v1529
    %v1531 = vpop.xlane.xlu0 %1530
    %v1532 = vsel %vm102, %v1524, 0.0
    %1533 = vadd.xlane.f32.xlu0 %v1532
    %v1534 = vpop.xlane.xlu0 %1533
    %v1535 = vmul.f32 %v1531, %v707
    %v1536 = vmul.f32 %v1534, %v707
    %v1537 = vsub.f32 %v1523, %v1535
    %v1538 = vsub.f32 %v1524, %v1536
    %v1539 = vmul.f32 %v1537, %v1537
    %v1540 = vmul.f32 %v1538, %v1538
    %v1541 = vsel %vm102, %v1539, 0.0
    %1542 = vadd.xlane.f32.xlu0 %v1541
    %v1543 = vpop.xlane.xlu0 %1542
    %v1544 = vsel %vm102, %v1540, 0.0
    %1545 = vadd.xlane.f32.xlu0 %v1544
    %v1546 = vpop.xlane.xlu0 %1545
    %v1547 = vmul.f32 %v1543, %v707
    %v1548 = vmul.f32 %v1546, %v707
    %v1549 = vadd.f32 %v1547, 1e-05
    %v1550 = vadd.f32 %v1548, 1e-05
    %v1551 = vrsqrt.pop %v1549
    %v1552 = vmul.f32 %v1551, %v1549
    %v1553 = vmul.f32 %v1552, %v1551
    %v1554 = vmul.f32 0.5, %v1553
    %v1555 = vsub.f32 1.5, %v1554
    %v1556 = vmul.f32 %v1551, %v1555
    %vm1557 = vweird.f32 %v1549
    %vm1558 = vweird.f32 %v1551
    %vm1559 = vmor %vm1557, %vm1558
    %v1560 = vsel %vm1559, %v1551, %v1556
    %v1561 = vrsqrt.pop %v1550
    %v1562 = vmul.f32 %v1561, %v1550
    %v1563 = vmul.f32 %v1562, %v1561
    %v1564 = vmul.f32 0.5, %v1563
    %v1565 = vsub.f32 1.5, %v1564
    %v1566 = vmul.f32 %v1561, %v1565
    %vm1567 = vweird.f32 %v1550
    %vm1568 = vweird.f32 %v1561
    %vm1569 = vmor %vm1567, %vm1568
    %v1570 = vsel %vm1569, %v1561, %v1566
    %v1571 = vmul.f32 %v1537, %v1560
    %v1572 = vmul.f32 %v1538, %v1570
    %v1574 = vperm.slane %v1526, 0
    %v1576 = vmul.f32 %v1571, %v1574
    %v1577 = vmul.f32 %v1572, %v1574
    %v1579 = vperm.slane %v1528, 0
    %v1581 = vadd.f32 %v1576, %v1579
    %v1582 = vadd.f32 %v1577, %v1579
    %v1583 = vpack.c.bf16 %v1582, %v1581
    %v1585 = vperm.slane %v915, 0
    %v1591 = vunpack.c.l.b16 %v910
    %v1592 = vunpack.c.l.b16 %v911
    %v1593 = vunpack.c.l.b16 %v912
    %v1594 = vunpack.c.l.b16 %v913
    %v1595 = vpack.c.b16 %v1592, %v1591
    %v1596 = vpack.c.b16 %v1594, %v1593
    %v1600 = vsel %vm102, %v1583, 0
    %1602 = vmatpush.bf16.msra.mxu0 0
    %1603 = vmatpush.bf16.msra.mxu0 0
    %1604 = vmatpush.bf16.msra.mxu0 0
    %1605 = vmatpush.bf16.msra.mxu0 0
    %1606 = vmatpush.bf16.msra.mxu0 0
    %1607 = vmatpush.bf16.msra.mxu0 0
    %1608 = vmatpush.bf16.msra.mxu0 %v1596
    %1609 = vmatpush.bf16.msra.mxu0 %v1595
    %1610 = vmatmul.bf16.gmra.mxu0 %v1600
    %v1611 = vpop.f32.mrf.mxu0
    %v1612 = vadd.f32 %v1585, %v1611
    %v1613 = vpop.f32.mrf.mxu0
    %v1614 = vadd.f32 %v1585, %v1613
    %1615 = vdwg.mxu0
    %v1616 = vmax.f32 %v1612, 0.0
    %v1617 = vmax.f32 %v1614, 0.0
    %v1618 = vpack.c.bf16 %v1617, %v1616
    %v1620 = vperm.slane %v926, 0
    %v1630 = vunpack.c.l.b16 %v917
    %v1631 = vunpack.c.l.b16 %v918
    %v1632 = vunpack.c.l.b16 %v919
    %v1633 = vunpack.c.l.b16 %v920
    %v1634 = vunpack.c.l.b16 %v921
    %v1635 = vunpack.c.l.b16 %v922
    %v1636 = vunpack.c.l.b16 %v923
    %v1637 = vunpack.c.l.b16 %v924
    %v1638 = vpack.c.b16 %v1631, %v1630
    %v1639 = vpack.c.b16 %v1633, %v1632
    %v1640 = vpack.c.b16 %v1635, %v1634
    %v1641 = vpack.c.b16 %v1637, %v1636
    %v1647 = vsel %vm819, %v1618, 0
    %1649 = vmatpush.bf16.msra.mxu0 0
    %1650 = vmatpush.bf16.msra.mxu0 0
    %1651 = vmatpush.bf16.msra.mxu0 0
    %1652 = vmatpush.bf16.msra.mxu0 0
    %1653 = vmatpush.bf16.msra.mxu0 %v1641
    %1654 = vmatpush.bf16.msra.mxu0 %v1640
    %1655 = vmatpush.bf16.msra.mxu0 %v1639
    %1656 = vmatpush.bf16.msra.mxu0 %v1638
    %1657 = vmatmul.bf16.gmra.mxu0 %v1647
    %v1658 = vpop.f32.mrf.mxu0
    %v1659 = vadd.f32 %v1620, %v1658
    %v1660 = vpop.f32.mrf.mxu0
    %v1661 = vadd.f32 %v1620, %v1660
    %1662 = vdwg.mxu0
    %v1663 = vadd.f32 %v1581, %v1659
    %v1664 = vadd.f32 %v1582, %v1661
    %s1665 = scalar_lea.vmem %s13, 1
    %v1666 = vld [vmem:[%s1665] sm:$0x1]
    %s1667 = scalar_lea.vmem %s14, 1
    %v1668 = vld [vmem:[%s1667] sm:$0x1]
    %v1669 = vsel %vm102, %v1663, 0.0
    %1670 = vadd.xlane.f32.xlu0 %v1669
    %v1671 = vpop.xlane.xlu0 %1670
    %v1672 = vsel %vm102, %v1664, 0.0
    %1673 = vadd.xlane.f32.xlu0 %v1672
    %v1674 = vpop.xlane.xlu0 %1673
    %v1675 = vmul.f32 %v1671, %v707
    %v1676 = vmul.f32 %v1674, %v707
    %v1677 = vsub.f32 %v1663, %v1675
    %v1678 = vsub.f32 %v1664, %v1676
    %v1679 = vmul.f32 %v1677, %v1677
    %v1680 = vmul.f32 %v1678, %v1678
    %v1681 = vsel %vm102, %v1679, 0.0
    %1682 = vadd.xlane.f32.xlu0 %v1681
    %v1683 = vpop.xlane.xlu0 %1682
    %v1684 = vsel %vm102, %v1680, 0.0
    %1685 = vadd.xlane.f32.xlu0 %v1684
    %v1686 = vpop.xlane.xlu0 %1685
    %v1687 = vmul.f32 %v1683, %v707
    %v1688 = vmul.f32 %v1686, %v707
    %v1689 = vadd.f32 %v1687, 1e-05
    %v1690 = vadd.f32 %v1688, 1e-05
    %v1691 = vrsqrt.pop %v1689
    %v1692 = vmul.f32 %v1691, %v1689
    %v1693 = vmul.f32 %v1692, %v1691
    %v1694 = vmul.f32 0.5, %v1693
    %v1695 = vsub.f32 1.5, %v1694
    %v1696 = vmul.f32 %v1691, %v1695
    %vm1697 = vweird.f32 %v1689
    %vm1698 = vweird.f32 %v1691
    %vm1699 = vmor %vm1697, %vm1698
    %v1700 = vsel %vm1699, %v1691, %v1696
    %v1701 = vrsqrt.pop %v1690
    %v1702 = vmul.f32 %v1701, %v1690
    %v1703 = vmul.f32 %v1702, %v1701
    %v1704 = vmul.f32 0.5, %v1703
    %v1705 = vsub.f32 1.5, %v1704
    %v1706 = vmul.f32 %v1701, %v1705
    %vm1707 = vweird.f32 %v1690
    %vm1708 = vweird.f32 %v1701
    %vm1709 = vmor %vm1707, %vm1708
    %v1710 = vsel %vm1709, %v1701, %v1706
    %v1711 = vmul.f32 %v1677, %v1700
    %v1712 = vmul.f32 %v1678, %v1710
    %v1714 = vperm.slane %v1666, 0
    %v1716 = vmul.f32 %v1711, %v1714
    %v1717 = vmul.f32 %v1712, %v1714
    %v1719 = vperm.slane %v1668, 0
    %v1721 = vadd.f32 %v1716, %v1719
    %v1722 = vadd.f32 %v1717, %v1719
    %1723 = vst.msk [vmem:[#allocation2] sm:$0xff] %vm102, %v1721
    %1724 = vst.msk [vmem:[#allocation2 + $0x8] sm:$0xff] %vm102, %v1722
    // Predicated region
    $region62: #{encoder_forward.1} parent=1 // pred_check
      _
    $region63: #{encoder_forward.1} parent=1 // pred_check_branch
      %1726 = sbr.rel (0) target = $region65
    $region64: #{encoder_forward.1} parent=1 // pred_region
      %1728 = vsyncadd [#allocation3], 0
      %s1729 = sshll.u32 [#allocation2], 4
      %s1730 = int_to_ptr.vmem [resolvable:$true] %s1729
      %s1731 = sshll.u32 %s15, 4
      %s1732 = int_to_ptr.hbm [resolvable:$true] %s1731
      %1737 = dma.vmem_to_hbm [thread:$0]  %s1730, 256, %s1732, [#allocation3], 128, 128, 8
    $region65: #{encoder_forward.1} parent=1 // pred_fallthru
      _
    // Predicated region
    $region66: #{encoder_forward.1} parent=1 // pred_check
      _
    $region67: #{encoder_forward.1} parent=1 // pred_check_branch
      %1739 = sbr.rel (0) target = $region69
    $region68: #{encoder_forward.1} parent=1 // pred_region
      %1741 = dma.done [#allocation3], 256
    $region69: #{encoder_forward.1} parent=1 // pred_fallthru
      _
    %1742 = vsyncpa [#allocation3], 1

</llo_original>
